<compile_context>
chip_gen: v5e
topology: v5e:2x2
jax: 0.10.0
libtpu: 0.0.40
codegen_flags: <defaults>
</compile_context>

<pallas_src>
import math
import functools

import jax
import jax.numpy as jnp
from jax.experimental import pallas as pl
from jax.experimental.pallas import tpu as pltpu

# ----------------------------- config ---------------------------------------
VOCAB_SIZE = 128
TYPE_VOCAB_SIZE = 2
MAX_POS = 16
HIDDEN = 32
NUM_HEADS = 2
HEAD_DIM = HIDDEN // NUM_HEADS
NUM_LAYERS = 2
INTERMEDIATE = 64
LN_EPS = 1e-12
BATCH = 2
SEQ = 8


# --------------------------- per-(sequence, layer) kernel --------------------
def _bert_layer_kernel(emb_ref, mask_ref, embln_ref,
                       qkvw_ref, qkvb_ref, ow_ref,
                       iw_ref, ib_ref, outw_ref, vec_ref,
                       o_ref, *, num_heads, head_dim, eps):
    """One grid step = one sequence x one transformer layer.

    The hidden state lives in o_ref (same output block across the layer axis),
    per-layer weights are streamed in via BlockSpecs on the layer grid axis.
    """
    layer = pl.program_id(1)
    scale = 1.0 / math.sqrt(head_dim)

    def layernorm(h, g, b):                       # h (S,H) f32, g/b (1,H) f32
        mu = jnp.mean(h, axis=-1, keepdims=True)
        var = jnp.mean(jnp.square(h - mu), axis=-1, keepdims=True)
        return (h - mu) * jax.lax.rsqrt(var + eps) * g + b

    # Layer 0: initialize the resident hidden state from the embedding LayerNorm.
    @pl.when(layer == 0)
    def _():
        embln = embln_ref[...]                    # (2, H): row 0 gamma, row 1 beta
        o_ref[0] = layernorm(emb_ref[0], embln[0:1], embln[1:2])

    x = o_ref[0]                                  # (S, H) f32, resident across layers
    add_mask = mask_ref[0]                        # (1, S) f32 additive key mask

    vec = vec_ref[0]                              # (6, H) packed f32 params
    ln1_g, ln1_b = vec[0:1], vec[1:2]
    ln2_g, ln2_b = vec[2:3], vec[3:4]
    attn_out_b, ffn_out_b = vec[4:5], vec[5:6]
    qkvb = qkvb_ref[0]                            # (3*heads, hd) f32

    x_bf = x.astype(jnp.bfloat16)

    # ---- multi-head self attention (per-head pre-split weights, no lane slicing) ----
    attn = jnp.zeros_like(x)                      # (S, H) f32 accumulator
    for h in range(num_heads):
        wq = qkvw_ref[0, 3 * h + 0]               # (H, hd) bf16
        wk = qkvw_ref[0, 3 * h + 1]
        wv = qkvw_ref[0, 3 * h + 2]
        q = jnp.dot(x_bf, wq, preferred_element_type=jnp.float32) + qkvb[3 * h + 0:3 * h + 1]
        k = jnp.dot(x_bf, wk, preferred_element_type=jnp.float32) + qkvb[3 * h + 1:3 * h + 2]
        v = jnp.dot(x_bf, wv, preferred_element_type=jnp.float32) + qkvb[3 * h + 2:3 * h + 3]

        # scores = q @ k^T  (contract last dims, no explicit transpose), f32 + mask
        s = jax.lax.dot_general(q.astype(jnp.bfloat16), k.astype(jnp.bfloat16),
                                (((1,), (1,)), ((), ())),
                                preferred_element_type=jnp.float32) * scale + add_mask
        s = s - jnp.max(s, axis=-1, keepdims=True)
        p = jnp.exp(s)
        p = p / jnp.sum(p, axis=-1, keepdims=True)   # exact division (reference parity)

        ctx = jnp.dot(p.astype(jnp.bfloat16), v.astype(jnp.bfloat16),
                      preferred_element_type=jnp.float32)               # (S, hd)
        # per-head output projection; summing over heads == concat(ctx) @ W_o
        attn = attn + jnp.dot(ctx.astype(jnp.bfloat16), ow_ref[0, h],
                              preferred_element_type=jnp.float32)
    attn = attn + attn_out_b
    x = layernorm(attn + x, ln1_g, ln1_b)

    # ---- feed-forward with exact (erf) GELU, matching HF BERT ----
    ffn = jnp.dot(x.astype(jnp.bfloat16), iw_ref[0],
                  preferred_element_type=jnp.float32) + ib_ref[0]
    ffn = 0.5 * ffn * (1.0 + jax.lax.erf(ffn * (1.0 / math.sqrt(2.0))))
    ffn = jnp.dot(ffn.astype(jnp.bfloat16), outw_ref[0],
                  preferred_element_type=jnp.float32) + ffn_out_b
    x = layernorm(ffn + x, ln2_g, ln2_b)

    o_ref[0] = x


# --------------------------- parameter init ----------------------------------
def init_params(key):
    def normal(k, shape, scale=0.02):
        return (scale * jax.random.normal(k, shape)).astype(jnp.float32)

    H, I, NH, HD = HIDDEN, INTERMEDIATE, NUM_HEADS, HEAD_DIM
    keys = jax.random.split(key, 3 + NUM_LAYERS)
    params = {
        "word_emb": normal(keys[0], (VOCAB_SIZE, H)),
        "pos_emb": normal(keys[1], (MAX_POS, H)),
        "type_emb": normal(keys[2], (TYPE_VOCAB_SIZE, H)),
        # packed embedding LayerNorm: row 0 gamma, row 1 beta
        "emb_ln": jnp.concatenate(
            [jnp.ones((1, H), jnp.float32), jnp.zeros((1, H), jnp.float32)], axis=0),
    }

    qkv_w, qkv_b, o_w, i_w, i_b, out_w, vec = [], [], [], [], [], [], []
    for l in range(NUM_LAYERS):
        lk = jax.random.split(keys[3 + l], 12)
        wq, bq = normal(lk[0], (H, H)), normal(lk[1], (H,))
        wk, bk = normal(lk[2], (H, H)), normal(lk[3], (H,))
        wv, bv = normal(lk[4], (H, H)), normal(lk[5], (H,))
        wo, bo = normal(lk[6], (H, H)), normal(lk[7], (H,))
        wi, bi = normal(lk[8], (H, I)), normal(lk[9], (I,))
        w2, b2 = normal(lk[10], (I, H)), normal(lk[11], (H,))

        def split_cols(w):                       # (H, H) -> (heads, H, hd)
            return w.reshape(H, NH, HD).transpose(1, 0, 2)

        # fused, per-head-pre-split QKV projection: (3*heads, H, hd), index = 3*h + {q,k,v}
        qkv_w.append(jnp.stack([split_cols(wq), split_cols(wk), split_cols(wv)],
                               axis=1).reshape(NH * 3, H, HD))
        qkv_b.append(jnp.stack([bq.reshape(NH, HD), bk.reshape(NH, HD),
                                bv.reshape(NH, HD)], axis=1).reshape(NH * 3, HD))
        o_w.append(wo.reshape(NH, HD, H))        # per-head rows of W_o
        i_w.append(wi)
        i_b.append(bi.reshape(1, I))
        out_w.append(w2)
        # packed (6, H): ln1_g, ln1_b, ln2_g, ln2_b, attn_out_bias, ffn_out_bias
        vec.append(jnp.stack([jnp.ones((H,), jnp.float32), jnp.zeros((H,), jnp.float32),
                              jnp.ones((H,), jnp.float32), jnp.zeros((H,), jnp.float32),
                              bo, b2], axis=0))

    params.update({
        "qkv_w": jnp.stack(qkv_w).astype(jnp.bfloat16),   # MXU-native bf16 weights
        "qkv_b": jnp.stack(qkv_b),
        "o_w": jnp.stack(o_w).astype(jnp.bfloat16),
        "i_w": jnp.stack(i_w).astype(jnp.bfloat16),
        "i_b": jnp.stack(i_b),
        "out_w": jnp.stack(out_w).astype(jnp.bfloat16),
        "vec": jnp.stack(vec),
    })
    return params


# ------------------------------ forward --------------------------------------
def pretrained_language_model_forward(params, input_ids, token_type_ids, attention_mask):
    """Returns (last_hidden_state [B, S, H] f32, attention_mask == 0 [B, S] bool)."""
    B, S = input_ids.shape
    H, I, L = HIDDEN, INTERMEDIATE, NUM_LAYERS

    # --- embeddings (gathers are glue; done in plain JAX) ---
    positions = jnp.arange(S)
    emb = (params["word_emb"][input_ids]
           + params["type_emb"][token_type_ids]
           + params["pos_emb"][positions][None, :, :]).astype(jnp.float32)      # (B, S, H)

    # Per-sequence BERT additive key mask: 0 for real tokens, -10000 for padding.
    add_mask = ((1.0 - attention_mask.astype(jnp.float32)) * -10000.0)[:, None, :]  # (B, 1, S)

    kernel = functools.partial(_bert_layer_kernel, num_heads=NUM_HEADS,
                               head_dim=HEAD_DIM, eps=LN_EPS)

    in_specs = [
        pl.BlockSpec((1, S, H), lambda b, l: (b, 0, 0)),                           # embeddings
        pl.BlockSpec((1, 1, S), lambda b, l: (b, 0, 0)),                           # additive mask
        pl.BlockSpec((2, H), lambda b, l: (0, 0)),                                 # emb LN g/b
        pl.BlockSpec((1, 3 * NUM_HEADS, H, HEAD_DIM), lambda b, l: (l, 0, 0, 0)),  # qkv_w (bf16)
        pl.BlockSpec((1, 3 * NUM_HEADS, HEAD_DIM), lambda b, l: (l, 0, 0)),        # qkv_b
        pl.BlockSpec((1, NUM_HEADS, HEAD_DIM, H), lambda b, l: (l, 0, 0, 0)),      # o_w (bf16)
        pl.BlockSpec((1, H, I), lambda b, l: (l, 0, 0)),                           # i_w (bf16)
        pl.BlockSpec((1, 1, I), lambda b, l: (l, 0, 0)),                           # i_b
        pl.BlockSpec((1, I, H), lambda b, l: (l, 0, 0)),                           # out_w (bf16)
        pl.BlockSpec((1, 6, H), lambda b, l: (l, 0, 0)),                           # packed vectors
    ]

    x = pl.pallas_call(
        kernel,
        out_shape=jax.ShapeDtypeStruct((B, S, H), jnp.float32),
        grid_spec=pltpu.PrefetchScalarGridSpec(
            num_scalar_prefetch=0,
            grid=(B, L),                       # batch parallel, layers streamed
            in_specs=in_specs,
            out_specs=pl.BlockSpec((1, S, H), lambda b, l: (b, 0, 0)),
        ),
        compiler_params=pltpu.CompilerParams(
            dimension_semantics=("parallel", "arbitrary"),
            vmem_limit_bytes=32 * 1024 * 1024,
        ),
    )(emb, add_mask, params["emb_ln"], params["qkv_w"], params["qkv_b"],
      params["o_w"], params["i_w"], params["i_b"], params["out_w"], params["vec"])

    return x, (attention_mask == 0)


# -------------------------------- main ----------------------------------------
if __name__ == "__main__":
    key = jax.random.PRNGKey(0)
    pkey, ikey = jax.random.split(key)
    params = init_params(pkey)

    input_ids = jax.random.randint(ikey, (BATCH, SEQ), 0, VOCAB_SIZE, dtype=jnp.int32)
    token_type_ids = jnp.zeros((BATCH, SEQ), jnp.int32)
    # second sequence has 3 padding tokens at the end
    attention_mask = jnp.array(
        [[1, 1, 1, 1, 1, 1, 1, 1],
         [1, 1, 1, 1, 1, 0, 0, 0]], dtype=jnp.int32)

    fwd = jax.jit(pretrained_language_model_forward)
    hidden, pad_mask = fwd(params, input_ids, token_type_ids, attention_mask)
    jax.block_until_ready((hidden, pad_mask))

    assert hidden.shape == (BATCH, SEQ, HIDDEN) and hidden.dtype == jnp.float32
    assert pad_mask.shape == (BATCH, SEQ) and pad_mask.dtype == jnp.bool_
    assert bool(jnp.all(jnp.isfinite(hidden)))
    print("KERNEL_OK")
</pallas_src>

<mosaic_0001>
module attributes {stable_mosaic.version = 11 : i64} {
  func.func @_bert_layer_kernel(%arg0: i32, %arg1: i32, %arg2: memref<1x8x32xf32, #tpu.memory_space<vmem>>, %arg3: memref<1x1x8xf32, #tpu.memory_space<vmem>>, %arg4: memref<2x32xf32, #tpu.memory_space<vmem>>, %arg5: memref<1x6x32x16xbf16, #tpu.memory_space<vmem>>, %arg6: memref<1x6x16xf32, #tpu.memory_space<vmem>>, %arg7: memref<1x2x16x32xbf16, #tpu.memory_space<vmem>>, %arg8: memref<1x32x64xbf16, #tpu.memory_space<vmem>>, %arg9: memref<1x1x64xf32, #tpu.memory_space<vmem>>, %arg10: memref<1x64x32xbf16, #tpu.memory_space<vmem>>, %arg11: memref<1x6x32xf32, #tpu.memory_space<vmem>>, %arg12: memref<1x8x32xf32, #tpu.memory_space<vmem>>) attributes {dimension_semantics = [#tpu.dimension_semantics<parallel>, #tpu.dimension_semantics<arbitrary>], iteration_bounds = array<i64: 2, 2>, scalar_prefetch = 0 : i64, scratch_operands = 0 : i64, tpu.core_type = #tpu.core_type<tc>, window_params = [{transform_indices = @transform_0, window_bounds = array<i64: 1, 8, 32>}, {transform_indices = @transform_1, window_bounds = array<i64: 1, 1, 8>}, {pipeline_mode = #tpu.pipeline_mode<synchronous>, transform_indices = @transform_2, window_bounds = array<i64: 2, 32>}, {transform_indices = @transform_3, window_bounds = array<i64: 1, 6, 32, 16>}, {transform_indices = @transform_4, window_bounds = array<i64: 1, 6, 16>}, {transform_indices = @transform_5, window_bounds = array<i64: 1, 2, 16, 32>}, {transform_indices = @transform_6, window_bounds = array<i64: 1, 32, 64>}, {transform_indices = @transform_7, window_bounds = array<i64: 1, 1, 64>}, {transform_indices = @transform_8, window_bounds = array<i64: 1, 64, 32>}, {transform_indices = @transform_9, window_bounds = array<i64: 1, 6, 32>}, {transform_indices = @transform_10, window_bounds = array<i64: 1, 8, 32>}]} {
    %c0_i32 = arith.constant 0 : i32
    %0 = arith.cmpi eq, %arg1, %c0_i32 : i32
    %1 = arith.extui %0 : i1 to i32
    %c0_i32_0 = arith.constant 0 : i32
    %2 = arith.cmpi ne, %1, %c0_i32_0 : i32
    scf.if %2 {
      %c0_84 = arith.constant 0 : index
      %c0_85 = arith.constant 0 : index
      %176 = vector.load %arg4[%c0_84, %c0_85] : memref<2x32xf32, #tpu.memory_space<vmem>>, vector<2x32xf32>
      %c0_86 = arith.constant 0 : index
      %c0_87 = arith.constant 0 : index
      %c0_88 = arith.constant 0 : index
      %177 = vector.load %arg2[%c0_86, %c0_87, %c0_88] : memref<1x8x32xf32, #tpu.memory_space<vmem>>, vector<1x8x32xf32>
      %178 = vector.shape_cast %177 : vector<1x8x32xf32> to vector<8x32xf32>
      %179 = vector.extract_strided_slice %176 {offsets = [0, 0], sizes = [1, 32], strides = [1, 1]} : vector<2x32xf32> to vector<1x32xf32>
      %180 = vector.extract_strided_slice %176 {offsets = [1, 0], sizes = [1, 32], strides = [1, 1]} : vector<2x32xf32> to vector<1x32xf32>
      %cst_89 = arith.constant dense<0.000000e+00> : vector<8xf32>
      %181 = vector.multi_reduction <add>, %178, %cst_89 [1] : vector<8x32xf32> to vector<8xf32>
      %182 = vector.shape_cast %181 : vector<8xf32> to vector<8x1xf32>
      %cst_90 = arith.constant 3.200000e+01 : f32
      %183 = vector.broadcast %cst_90 : f32 to vector<8x1xf32>
      %184 = arith.divf %182, %183 : vector<8x1xf32>
      %185 = vector.broadcast %184 : vector<8x1xf32> to vector<8x32xf32>
      %186 = arith.subf %178, %185 : vector<8x32xf32>
      %187 = arith.mulf %186, %186 : vector<8x32xf32>
      %cst_91 = arith.constant dense<0.000000e+00> : vector<8xf32>
      %188 = vector.multi_reduction <add>, %187, %cst_91 [1] : vector<8x32xf32> to vector<8xf32>
      %189 = vector.shape_cast %188 : vector<8xf32> to vector<8x1xf32>
      %cst_92 = arith.constant 3.200000e+01 : f32
      %190 = vector.broadcast %cst_92 : f32 to vector<8x1xf32>
      %191 = arith.divf %189, %190 : vector<8x1xf32>
      %192 = vector.broadcast %184 : vector<8x1xf32> to vector<8x32xf32>
      %193 = arith.subf %178, %192 : vector<8x32xf32>
      %cst_93 = arith.constant 9.99999996E-13 : f32
      %194 = vector.broadcast %cst_93 : f32 to vector<8x1xf32>
      %195 = arith.addf %191, %194 : vector<8x1xf32>
      %196 = math.rsqrt %195 : vector<8x1xf32>
      %197 = vector.broadcast %196 : vector<8x1xf32> to vector<8x32xf32>
      %198 = arith.mulf %193, %197 : vector<8x32xf32>
      %199 = vector.broadcast %179 : vector<1x32xf32> to vector<8x32xf32>
      %200 = arith.mulf %198, %199 : vector<8x32xf32>
      %201 = vector.broadcast %180 : vector<1x32xf32> to vector<8x32xf32>
      %202 = arith.addf %200, %201 : vector<8x32xf32>
      %c0_94 = arith.constant 0 : index
      %c0_95 = arith.constant 0 : index
      %c0_96 = arith.constant 0 : index
      %203 = vector.load %arg12[%c0_94, %c0_95, %c0_96] : memref<1x8x32xf32, #tpu.memory_space<vmem>>, vector<1x8x32xf32>
      %204 = vector.shape_cast %203 : vector<1x8x32xf32> to vector<8x32xf32>
      %205 = vector.shape_cast %202 : vector<8x32xf32> to vector<1x8x32xf32>
      tpu.vector_store %arg12[%c0_94, %c0_95, %c0_96], %205 {strides = array<i32>} : memref<1x8x32xf32, #tpu.memory_space<vmem>>, vector<1x8x32xf32>,
    } else {
    }
    %c0 = arith.constant 0 : index
    %c0_1 = arith.constant 0 : index
    %c0_2 = arith.constant 0 : index
    %3 = vector.load %arg12[%c0, %c0_1, %c0_2] : memref<1x8x32xf32, #tpu.memory_space<vmem>>, vector<1x8x32xf32>
    %4 = vector.shape_cast %3 : vector<1x8x32xf32> to vector<8x32xf32>
    %c0_3 = arith.constant 0 : index
    %c0_4 = arith.constant 0 : index
    %c0_5 = arith.constant 0 : index
    %5 = vector.load %arg3[%c0_3, %c0_4, %c0_5] : memref<1x1x8xf32, #tpu.memory_space<vmem>>, vector<1x1x8xf32>
    %6 = vector.shape_cast %5 : vector<1x1x8xf32> to vector<1x8xf32>
    %c0_6 = arith.constant 0 : index
    %c0_7 = arith.constant 0 : index
    %c0_8 = arith.constant 0 : index
    %7 = vector.load %arg11[%c0_6, %c0_7, %c0_8] : memref<1x6x32xf32, #tpu.memory_space<vmem>>, vector<1x6x32xf32>
    %8 = vector.shape_cast %7 : vector<1x6x32xf32> to vector<6x32xf32>
    %9 = vector.extract_strided_slice %8 {offsets = [0, 0], sizes = [1, 32], strides = [1, 1]} : vector<6x32xf32> to vector<1x32xf32>
    %10 = vector.extract_strided_slice %8 {offsets = [1, 0], sizes = [1, 32], strides = [1, 1]} : vector<6x32xf32> to vector<1x32xf32>
    %11 = vector.extract_strided_slice %8 {offsets = [2, 0], sizes = [1, 32], strides = [1, 1]} : vector<6x32xf32> to vector<1x32xf32>
    %12 = vector.extract_strided_slice %8 {offsets = [3, 0], sizes = [1, 32], strides = [1, 1]} : vector<6x32xf32> to vector<1x32xf32>
    %13 = vector.extract_strided_slice %8 {offsets = [4, 0], sizes = [1, 32], strides = [1, 1]} : vector<6x32xf32> to vector<1x32xf32>
    %14 = vector.extract_strided_slice %8 {offsets = [5, 0], sizes = [1, 32], strides = [1, 1]} : vector<6x32xf32> to vector<1x32xf32>
    %c0_9 = arith.constant 0 : index
    %c0_10 = arith.constant 0 : index
    %c0_11 = arith.constant 0 : index
    %15 = vector.load %arg6[%c0_9, %c0_10, %c0_11] : memref<1x6x16xf32, #tpu.memory_space<vmem>>, vector<1x6x16xf32>
    %16 = vector.shape_cast %15 : vector<1x6x16xf32> to vector<6x16xf32>
    %17 = arith.truncf %4 : vector<8x32xf32> to vector<8x32xbf16>
    %cst = arith.constant 0.000000e+00 : f32
    %18 = vector.broadcast %cst : f32 to vector<8x32xf32>
    %c0_12 = arith.constant 0 : index
    %c0_13 = arith.constant 0 : index
    %c0_14 = arith.constant 0 : index
    %c0_15 = arith.constant 0 : index
    %19 = vector.load %arg5[%c0_12, %c0_13, %c0_14, %c0_15] : memref<1x6x32x16xbf16, #tpu.memory_space<vmem>>, vector<1x1x32x16xbf16>
    %20 = vector.shape_cast %19 : vector<1x1x32x16xbf16> to vector<32x16xbf16>
    %c0_16 = arith.constant 0 : index
    %c1 = arith.constant 1 : index
    %c0_17 = arith.constant 0 : index
    %c0_18 = arith.constant 0 : index
    %21 = vector.load %arg5[%c0_16, %c1, %c0_17, %c0_18] : memref<1x6x32x16xbf16, #tpu.memory_space<vmem>>, vector<1x1x32x16xbf16>
    %22 = vector.shape_cast %21 : vector<1x1x32x16xbf16> to vector<32x16xbf16>
    %c0_19 = arith.constant 0 : index
    %c2 = arith.constant 2 : index
    %c0_20 = arith.constant 0 : index
    %c0_21 = arith.constant 0 : index
    %23 = vector.load %arg5[%c0_19, %c2, %c0_20, %c0_21] : memref<1x6x32x16xbf16, #tpu.memory_space<vmem>>, vector<1x1x32x16xbf16>
    %24 = vector.shape_cast %23 : vector<1x1x32x16xbf16> to vector<32x16xbf16>
    %cst_22 = arith.constant dense<0.000000e+00> : vector<8x16xf32>
    %25 = tpu.matmul %17, %20, %cst_22 {dimension_numbers = #tpu.dot_dimension_numbers<[1], [0], [0], [1], [0, 0, 1, 1], [], []>} : vector<8x32xbf16>, vector<32x16xbf16>, vector<8x16xf32> -> vector<8x16xf32>
    %26 = vector.extract_strided_slice %16 {offsets = [0, 0], sizes = [1, 16], strides = [1, 1]} : vector<6x16xf32> to vector<1x16xf32>
    %27 = vector.broadcast %26 : vector<1x16xf32> to vector<8x16xf32>
    %28 = arith.addf %25, %27 : vector<8x16xf32>
    %cst_23 = arith.constant dense<0.000000e+00> : vector<8x16xf32>
    %29 = tpu.matmul %17, %22, %cst_23 {dimension_numbers = #tpu.dot_dimension_numbers<[1], [0], [0], [1], [0, 0, 1, 1], [], []>} : vector<8x32xbf16>, vector<32x16xbf16>, vector<8x16xf32> -> vector<8x16xf32>
    %30 = vector.extract_strided_slice %16 {offsets = [1, 0], sizes = [1, 16], strides = [1, 1]} : vector<6x16xf32> to vector<1x16xf32>
    %31 = vector.broadcast %30 : vector<1x16xf32> to vector<8x16xf32>
    %32 = arith.addf %29, %31 : vector<8x16xf32>
    %cst_24 = arith.constant dense<0.000000e+00> : vector<8x16xf32>
    %33 = tpu.matmul %17, %24, %cst_24 {dimension_numbers = #tpu.dot_dimension_numbers<[1], [0], [0], [1], [0, 0, 1, 1], [], []>} : vector<8x32xbf16>, vector<32x16xbf16>, vector<8x16xf32> -> vector<8x16xf32>
    %34 = vector.extract_strided_slice %16 {offsets = [2, 0], sizes = [1, 16], strides = [1, 1]} : vector<6x16xf32> to vector<1x16xf32>
    %35 = vector.broadcast %34 : vector<1x16xf32> to vector<8x16xf32>
    %36 = arith.addf %33, %35 : vector<8x16xf32>
    %37 = arith.truncf %28 : vector<8x16xf32> to vector<8x16xbf16>
    %38 = arith.truncf %32 : vector<8x16xf32> to vector<8x16xbf16>
    %cst_25 = arith.constant dense<0.000000e+00> : vector<8x8xf32>
    %39 = tpu.matmul %37, %38, %cst_25 {dimension_numbers = #tpu.dot_dimension_numbers<[1], [1], [0], [0], [0, 0, 1, 0], [], []>} : vector<8x16xbf16>, vector<8x16xbf16>, vector<8x8xf32> -> vector<8x8xf32>
    %cst_26 = arith.constant 2.500000e-01 : f32
    %40 = vector.broadcast %cst_26 : f32 to vector<8x8xf32>
    %41 = arith.mulf %39, %40 : vector<8x8xf32>
    %42 = vector.broadcast %6 : vector<1x8xf32> to vector<8x8xf32>
    %43 = arith.addf %41, %42 : vector<8x8xf32>
    %cst_27 = arith.constant dense<0xFF800000> : vector<8xf32>
    %44 = vector.multi_reduction <maximumf>, %43, %cst_27 [1] : vector<8x8xf32> to vector<8xf32>
    %45 = vector.shape_cast %44 : vector<8xf32> to vector<8x1xf32>
    %46 = vector.broadcast %45 : vector<8x1xf32> to vector<8x8xf32>
    %47 = arith.subf %43, %46 : vector<8x8xf32>
    %48 = math.exp %47 : vector<8x8xf32>
    %cst_28 = arith.constant dense<0.000000e+00> : vector<8xf32>
    %49 = vector.multi_reduction <add>, %48, %cst_28 [1] : vector<8x8xf32> to vector<8xf32>
    %50 = vector.shape_cast %49 : vector<8xf32> to vector<8x1xf32>
    %51 = vector.broadcast %50 : vector<8x1xf32> to vector<8x8xf32>
    %52 = arith.divf %48, %51 : vector<8x8xf32>
    %53 = arith.truncf %52 : vector<8x8xf32> to vector<8x8xbf16>
    %54 = arith.truncf %36 : vector<8x16xf32> to vector<8x16xbf16>
    %cst_29 = arith.constant dense<0.000000e+00> : vector<8x16xf32>
    %55 = tpu.matmul %53, %54, %cst_29 {dimension_numbers = #tpu.dot_dimension_numbers<[1], [0], [0], [1], [0, 0, 1, 1], [], []>} : vector<8x8xbf16>, vector<8x16xbf16>, vector<8x16xf32> -> vector<8x16xf32>
    %56 = arith.truncf %55 : vector<8x16xf32> to vector<8x16xbf16>
    %c0_30 = arith.constant 0 : index
    %c0_31 = arith.constant 0 : index
    %c0_32 = arith.constant 0 : index
    %c0_33 = arith.constant 0 : index
    %57 = vector.load %arg7[%c0_30, %c0_31, %c0_32, %c0_33] : memref<1x2x16x32xbf16, #tpu.memory_space<vmem>>, vector<1x1x16x32xbf16>
    %58 = vector.shape_cast %57 : vector<1x1x16x32xbf16> to vector<16x32xbf16>
    %cst_34 = arith.constant dense<0.000000e+00> : vector<8x32xf32>
    %59 = tpu.matmul %56, %58, %cst_34 {dimension_numbers = #tpu.dot_dimension_numbers<[1], [0], [0], [1], [0, 0, 1, 1], [], []>} : vector<8x16xbf16>, vector<16x32xbf16>, vector<8x32xf32> -> vector<8x32xf32>
    %60 = arith.addf %18, %59 : vector<8x32xf32>
    %c0_35 = arith.constant 0 : index
    %c3 = arith.constant 3 : index
    %c0_36 = arith.constant 0 : index
    %c0_37 = arith.constant 0 : index
    %61 = vector.load %arg5[%c0_35, %c3, %c0_36, %c0_37] : memref<1x6x32x16xbf16, #tpu.memory_space<vmem>>, vector<1x1x32x16xbf16>
    %62 = vector.shape_cast %61 : vector<1x1x32x16xbf16> to vector<32x16xbf16>
    %c0_38 = arith.constant 0 : index
    %c4 = arith.constant 4 : index
    %c0_39 = arith.constant 0 : index
    %c0_40 = arith.constant 0 : index
    %63 = vector.load %arg5[%c0_38, %c4, %c0_39, %c0_40] : memref<1x6x32x16xbf16, #tpu.memory_space<vmem>>, vector<1x1x32x16xbf16>
    %64 = vector.shape_cast %63 : vector<1x1x32x16xbf16> to vector<32x16xbf16>
    %c0_41 = arith.constant 0 : index
    %c5 = arith.constant 5 : index
    %c0_42 = arith.constant 0 : index
    %c0_43 = arith.constant 0 : index
    %65 = vector.load %arg5[%c0_41, %c5, %c0_42, %c0_43] : memref<1x6x32x16xbf16, #tpu.memory_space<vmem>>, vector<1x1x32x16xbf16>
    %66 = vector.shape_cast %65 : vector<1x1x32x16xbf16> to vector<32x16xbf16>
    %cst_44 = arith.constant dense<0.000000e+00> : vector<8x16xf32>
    %67 = tpu.matmul %17, %62, %cst_44 {dimension_numbers = #tpu.dot_dimension_numbers<[1], [0], [0], [1], [0, 0, 1, 1], [], []>} : vector<8x32xbf16>, vector<32x16xbf16>, vector<8x16xf32> -> vector<8x16xf32>
    %68 = vector.extract_strided_slice %16 {offsets = [3, 0], sizes = [1, 16], strides = [1, 1]} : vector<6x16xf32> to vector<1x16xf32>
    %69 = vector.broadcast %68 : vector<1x16xf32> to vector<8x16xf32>
    %70 = arith.addf %67, %69 : vector<8x16xf32>
    %cst_45 = arith.constant dense<0.000000e+00> : vector<8x16xf32>
    %71 = tpu.matmul %17, %64, %cst_45 {dimension_numbers = #tpu.dot_dimension_numbers<[1], [0], [0], [1], [0, 0, 1, 1], [], []>} : vector<8x32xbf16>, vector<32x16xbf16>, vector<8x16xf32> -> vector<8x16xf32>
    %72 = vector.extract_strided_slice %16 {offsets = [4, 0], sizes = [1, 16], strides = [1, 1]} : vector<6x16xf32> to vector<1x16xf32>
    %73 = vector.broadcast %72 : vector<1x16xf32> to vector<8x16xf32>
    %74 = arith.addf %71, %73 : vector<8x16xf32>
    %cst_46 = arith.constant dense<0.000000e+00> : vector<8x16xf32>
    %75 = tpu.matmul %17, %66, %cst_46 {dimension_numbers = #tpu.dot_dimension_numbers<[1], [0], [0], [1], [0, 0, 1, 1], [], []>} : vector<8x32xbf16>, vector<32x16xbf16>, vector<8x16xf32> -> vector<8x16xf32>
    %76 = vector.extract_strided_slice %16 {offsets = [5, 0], sizes = [1, 16], strides = [1, 1]} : vector<6x16xf32> to vector<1x16xf32>
    %77 = vector.broadcast %76 : vector<1x16xf32> to vector<8x16xf32>
    %78 = arith.addf %75, %77 : vector<8x16xf32>
    %79 = arith.truncf %70 : vector<8x16xf32> to vector<8x16xbf16>
    %80 = arith.truncf %74 : vector<8x16xf32> to vector<8x16xbf16>
    %cst_47 = arith.constant dense<0.000000e+00> : vector<8x8xf32>
    %81 = tpu.matmul %79, %80, %cst_47 {dimension_numbers = #tpu.dot_dimension_numbers<[1], [1], [0], [0], [0, 0, 1, 0], [], []>} : vector<8x16xbf16>, vector<8x16xbf16>, vector<8x8xf32> -> vector<8x8xf32>
    %cst_48 = arith.constant 2.500000e-01 : f32
    %82 = vector.broadcast %cst_48 : f32 to vector<8x8xf32>
    %83 = arith.mulf %81, %82 : vector<8x8xf32>
    %84 = vector.broadcast %6 : vector<1x8xf32> to vector<8x8xf32>
    %85 = arith.addf %83, %84 : vector<8x8xf32>
    %cst_49 = arith.constant dense<0xFF800000> : vector<8xf32>
    %86 = vector.multi_reduction <maximumf>, %85, %cst_49 [1] : vector<8x8xf32> to vector<8xf32>
    %87 = vector.shape_cast %86 : vector<8xf32> to vector<8x1xf32>
    %88 = vector.broadcast %87 : vector<8x1xf32> to vector<8x8xf32>
    %89 = arith.subf %85, %88 : vector<8x8xf32>
    %90 = math.exp %89 : vector<8x8xf32>
    %cst_50 = arith.constant dense<0.000000e+00> : vector<8xf32>
    %91 = vector.multi_reduction <add>, %90, %cst_50 [1] : vector<8x8xf32> to vector<8xf32>
    %92 = vector.shape_cast %91 : vector<8xf32> to vector<8x1xf32>
    %93 = vector.broadcast %92 : vector<8x1xf32> to vector<8x8xf32>
    %94 = arith.divf %90, %93 : vector<8x8xf32>
    %95 = arith.truncf %94 : vector<8x8xf32> to vector<8x8xbf16>
    %96 = arith.truncf %78 : vector<8x16xf32> to vector<8x16xbf16>
    %cst_51 = arith.constant dense<0.000000e+00> : vector<8x16xf32>
    %97 = tpu.matmul %95, %96, %cst_51 {dimension_numbers = #tpu.dot_dimension_numbers<[1], [0], [0], [1], [0, 0, 1, 1], [], []>} : vector<8x8xbf16>, vector<8x16xbf16>, vector<8x16xf32> -> vector<8x16xf32>
    %98 = arith.truncf %97 : vector<8x16xf32> to vector<8x16xbf16>
    %c0_52 = arith.constant 0 : index
    %c1_53 = arith.constant 1 : index
    %c0_54 = arith.constant 0 : index
    %c0_55 = arith.constant 0 : index
    %99 = vector.load %arg7[%c0_52, %c1_53, %c0_54, %c0_55] : memref<1x2x16x32xbf16, #tpu.memory_space<vmem>>, vector<1x1x16x32xbf16>
    %100 = vector.shape_cast %99 : vector<1x1x16x32xbf16> to vector<16x32xbf16>
    %cst_56 = arith.constant dense<0.000000e+00> : vector<8x32xf32>
    %101 = tpu.matmul %98, %100, %cst_56 {dimension_numbers = #tpu.dot_dimension_numbers<[1], [0], [0], [1], [0, 0, 1, 1], [], []>} : vector<8x16xbf16>, vector<16x32xbf16>, vector<8x32xf32> -> vector<8x32xf32>
    %102 = arith.addf %60, %101 : vector<8x32xf32>
    %103 = vector.broadcast %13 : vector<1x32xf32> to vector<8x32xf32>
    %104 = arith.addf %102, %103 : vector<8x32xf32>
    %105 = arith.addf %104, %4 : vector<8x32xf32>
    %cst_57 = arith.constant dense<0.000000e+00> : vector<8xf32>
    %106 = vector.multi_reduction <add>, %105, %cst_57 [1] : vector<8x32xf32> to vector<8xf32>
    %107 = vector.shape_cast %106 : vector<8xf32> to vector<8x1xf32>
    %cst_58 = arith.constant 3.200000e+01 : f32
    %108 = vector.broadcast %cst_58 : f32 to vector<8x1xf32>
    %109 = arith.divf %107, %108 : vector<8x1xf32>
    %110 = vector.broadcast %109 : vector<8x1xf32> to vector<8x32xf32>
    %111 = arith.subf %105, %110 : vector<8x32xf32>
    %112 = arith.mulf %111, %111 : vector<8x32xf32>
    %cst_59 = arith.constant dense<0.000000e+00> : vector<8xf32>
    %113 = vector.multi_reduction <add>, %112, %cst_59 [1] : vector<8x32xf32> to vector<8xf32>
    %114 = vector.shape_cast %113 : vector<8xf32> to vector<8x1xf32>
    %cst_60 = arith.constant 3.200000e+01 : f32
    %115 = vector.broadcast %cst_60 : f32 to vector<8x1xf32>
    %116 = arith.divf %114, %115 : vector<8x1xf32>
    %117 = vector.broadcast %109 : vector<8x1xf32> to vector<8x32xf32>
    %118 = arith.subf %105, %117 : vector<8x32xf32>
    %cst_61 = arith.constant 9.99999996E-13 : f32
    %119 = vector.broadcast %cst_61 : f32 to vector<8x1xf32>
    %120 = arith.addf %116, %119 : vector<8x1xf32>
    %121 = math.rsqrt %120 : vector<8x1xf32>
    %122 = vector.broadcast %121 : vector<8x1xf32> to vector<8x32xf32>
    %123 = arith.mulf %118, %122 : vector<8x32xf32>
    %124 = vector.broadcast %9 : vector<1x32xf32> to vector<8x32xf32>
    %125 = arith.mulf %123, %124 : vector<8x32xf32>
    %126 = vector.broadcast %10 : vector<1x32xf32> to vector<8x32xf32>
    %127 = arith.addf %125, %126 : vector<8x32xf32>
    %128 = arith.truncf %127 : vector<8x32xf32> to vector<8x32xbf16>
    %c0_62 = arith.constant 0 : index
    %c0_63 = arith.constant 0 : index
    %c0_64 = arith.constant 0 : index
    %129 = vector.load %arg8[%c0_62, %c0_63, %c0_64] : memref<1x32x64xbf16, #tpu.memory_space<vmem>>, vector<1x32x64xbf16>
    %130 = vector.shape_cast %129 : vector<1x32x64xbf16> to vector<32x64xbf16>
    %cst_65 = arith.constant dense<0.000000e+00> : vector<8x64xf32>
    %131 = tpu.matmul %128, %130, %cst_65 {dimension_numbers = #tpu.dot_dimension_numbers<[1], [0], [0], [1], [0, 0, 1, 1], [], []>} : vector<8x32xbf16>, vector<32x64xbf16>, vector<8x64xf32> -> vector<8x64xf32>
    %c0_66 = arith.constant 0 : index
    %c0_67 = arith.constant 0 : index
    %c0_68 = arith.constant 0 : index
    %132 = vector.load %arg9[%c0_66, %c0_67, %c0_68] : memref<1x1x64xf32, #tpu.memory_space<vmem>>, vector<1x1x64xf32>
    %133 = vector.shape_cast %132 : vector<1x1x64xf32> to vector<1x64xf32>
    %134 = vector.broadcast %133 : vector<1x64xf32> to vector<8x64xf32>
    %135 = arith.addf %131, %134 : vector<8x64xf32>
    %cst_69 = arith.constant 5.000000e-01 : f32
    %136 = vector.broadcast %cst_69 : f32 to vector<8x64xf32>
    %137 = arith.mulf %136, %135 : vector<8x64xf32>
    %cst_70 = arith.constant 0.707106769 : f32
    %138 = vector.broadcast %cst_70 : f32 to vector<8x64xf32>
    %139 = arith.mulf %135, %138 : vector<8x64xf32>
    %140 = math.erf %139 : vector<8x64xf32>
    %cst_71 = arith.constant 1.000000e+00 : f32
    %141 = vector.broadcast %cst_71 : f32 to vector<8x64xf32>
    %142 = arith.addf %141, %140 : vector<8x64xf32>
    %143 = arith.mulf %137, %142 : vector<8x64xf32>
    %144 = arith.truncf %143 : vector<8x64xf32> to vector<8x64xbf16>
    %c0_72 = arith.constant 0 : index
    %c0_73 = arith.constant 0 : index
    %c0_74 = arith.constant 0 : index
    %145 = vector.load %arg10[%c0_72, %c0_73, %c0_74] : memref<1x64x32xbf16, #tpu.memory_space<vmem>>, vector<1x64x32xbf16>
    %146 = vector.shape_cast %145 : vector<1x64x32xbf16> to vector<64x32xbf16>
    %cst_75 = arith.constant dense<0.000000e+00> : vector<8x32xf32>
    %147 = tpu.matmul %144, %146, %cst_75 {dimension_numbers = #tpu.dot_dimension_numbers<[1], [0], [0], [1], [0, 0, 1, 1], [], []>} : vector<8x64xbf16>, vector<64x32xbf16>, vector<8x32xf32> -> vector<8x32xf32>
    %148 = vector.broadcast %14 : vector<1x32xf32> to vector<8x32xf32>
    %149 = arith.addf %147, %148 : vector<8x32xf32>
    %150 = arith.addf %149, %127 : vector<8x32xf32>
    %cst_76 = arith.constant dense<0.000000e+00> : vector<8xf32>
    %151 = vector.multi_reduction <add>, %150, %cst_76 [1] : vector<8x32xf32> to vector<8xf32>
    %152 = vector.shape_cast %151 : vector<8xf32> to vector<8x1xf32>
    %cst_77 = arith.constant 3.200000e+01 : f32
    %153 = vector.broadcast %cst_77 : f32 to vector<8x1xf32>
    %154 = arith.divf %152, %153 : vector<8x1xf32>
    %155 = vector.broadcast %154 : vector<8x1xf32> to vector<8x32xf32>
    %156 = arith.subf %150, %155 : vector<8x32xf32>
    %157 = arith.mulf %156, %156 : vector<8x32xf32>
    %cst_78 = arith.constant dense<0.000000e+00> : vector<8xf32>
    %158 = vector.multi_reduction <add>, %157, %cst_78 [1] : vector<8x32xf32> to vector<8xf32>
    %159 = vector.shape_cast %158 : vector<8xf32> to vector<8x1xf32>
    %cst_79 = arith.constant 3.200000e+01 : f32
    %160 = vector.broadcast %cst_79 : f32 to vector<8x1xf32>
    %161 = arith.divf %159, %160 : vector<8x1xf32>
    %162 = vector.broadcast %154 : vector<8x1xf32> to vector<8x32xf32>
    %163 = arith.subf %150, %162 : vector<8x32xf32>
    %cst_80 = arith.constant 9.99999996E-13 : f32
    %164 = vector.broadcast %cst_80 : f32 to vector<8x1xf32>
    %165 = arith.addf %161, %164 : vector<8x1xf32>
    %166 = math.rsqrt %165 : vector<8x1xf32>
    %167 = vector.broadcast %166 : vector<8x1xf32> to vector<8x32xf32>
    %168 = arith.mulf %163, %167 : vector<8x32xf32>
    %169 = vector.broadcast %11 : vector<1x32xf32> to vector<8x32xf32>
    %170 = arith.mulf %168, %169 : vector<8x32xf32>
    %171 = vector.broadcast %12 : vector<1x32xf32> to vector<8x32xf32>
    %172 = arith.addf %170, %171 : vector<8x32xf32>
    %c0_81 = arith.constant 0 : index
    %c0_82 = arith.constant 0 : index
    %c0_83 = arith.constant 0 : index
    %173 = vector.load %arg12[%c0_81, %c0_82, %c0_83] : memref<1x8x32xf32, #tpu.memory_space<vmem>>, vector<1x8x32xf32>
    %174 = vector.shape_cast %173 : vector<1x8x32xf32> to vector<8x32xf32>
    %175 = vector.shape_cast %172 : vector<8x32xf32> to vector<1x8x32xf32>
    tpu.vector_store %arg12[%c0_81, %c0_82, %c0_83], %175 {strides = array<i32>} : memref<1x8x32xf32, #tpu.memory_space<vmem>>, vector<1x8x32xf32>,
    return
  }
  func.func @transform_0(%arg0: i32, %arg1: i32) -> (i32, i32, i32) {
    %c0_i32 = arith.constant 0 : i32
    %c0_i32_0 = arith.constant 0 : i32
    %c0_i32_1 = arith.constant 0 : i32
    return %arg0, %c0_i32, %c0_i32_0 : i32, i32, i32
  }
  func.func @transform_1(%arg0: i32, %arg1: i32) -> (i32, i32, i32) {
    %c0_i32 = arith.constant 0 : i32
    %c0_i32_0 = arith.constant 0 : i32
    %c0_i32_1 = arith.constant 0 : i32
    return %arg0, %c0_i32, %c0_i32_0 : i32, i32, i32
  }
  func.func @transform_2(%arg0: i32, %arg1: i32) -> (i32, i32) {
    %c0_i32 = arith.constant 0 : i32
    %c0_i32_0 = arith.constant 0 : i32
    %c0_i32_1 = arith.constant 0 : i32
    return %c0_i32, %c0_i32_0 : i32, i32
  }
  func.func @transform_3(%arg0: i32, %arg1: i32) -> (i32, i32, i32, i32) {
    %c0_i32 = arith.constant 0 : i32
    %c0_i32_0 = arith.constant 0 : i32
    %c0_i32_1 = arith.constant 0 : i32
    %c0_i32_2 = arith.constant 0 : i32
    return %arg1, %c0_i32, %c0_i32_0, %c0_i32_1 : i32, i32, i32, i32
  }
  func.func @transform_4(%arg0: i32, %arg1: i32) -> (i32, i32, i32) {
    %c0_i32 = arith.constant 0 : i32
    %c0_i32_0 = arith.constant 0 : i32
    %c0_i32_1 = arith.constant 0 : i32
    return %arg1, %c0_i32, %c0_i32_0 : i32, i32, i32
  }
  func.func @transform_5(%arg0: i32, %arg1: i32) -> (i32, i32, i32, i32) {
    %c0_i32 = arith.constant 0 : i32
    %c0_i32_0 = arith.constant 0 : i32
    %c0_i32_1 = arith.constant 0 : i32
    %c0_i32_2 = arith.constant 0 : i32
    return %arg1, %c0_i32, %c0_i32_0, %c0_i32_1 : i32, i32, i32, i32
  }
  func.func @transform_6(%arg0: i32, %arg1: i32) -> (i32, i32, i32) {
    %c0_i32 = arith.constant 0 : i32
    %c0_i32_0 = arith.constant 0 : i32
    %c0_i32_1 = arith.constant 0 : i32
    return %arg1, %c0_i32, %c0_i32_0 : i32, i32, i32
  }
  func.func @transform_7(%arg0: i32, %arg1: i32) -> (i32, i32, i32) {
    %c0_i32 = arith.constant 0 : i32
    %c0_i32_0 = arith.constant 0 : i32
    %c0_i32_1 = arith.constant 0 : i32
    return %arg1, %c0_i32, %c0_i32_0 : i32, i32, i32
  }
  func.func @transform_8(%arg0: i32, %arg1: i32) -> (i32, i32, i32) {
    %c0_i32 = arith.constant 0 : i32
    %c0_i32_0 = arith.constant 0 : i32
    %c0_i32_1 = arith.constant 0 : i32
    return %arg1, %c0_i32, %c0_i32_0 : i32, i32, i32
  }
  func.func @transform_9(%arg0: i32, %arg1: i32) -> (i32, i32, i32) {
    %c0_i32 = arith.constant 0 : i32
    %c0_i32_0 = arith.constant 0 : i32
    %c0_i32_1 = arith.constant 0 : i32
    return %arg1, %c0_i32, %c0_i32_0 : i32, i32, i32
  }
  func.func @transform_10(%arg0: i32, %arg1: i32) -> (i32, i32, i32) {
    %c0_i32 = arith.constant 0 : i32
    %c0_i32_0 = arith.constant 0 : i32
    %c0_i32_1 = arith.constant 0 : i32
    return %arg0, %c0_i32, %c0_i32_0 : i32, i32, i32
  }
}

</mosaic_0001>

<llo_original>
// kernel: pretrained_language_model_forward.1
$region0: #{pretrained_language_model_forward.1}
  #allocation0 [shape = 'u32[]', space=smem, size = 0x4, offset = 0x4, fixed_abs, tag = 'smem constant byte address 0x4 - core index']
  #allocation1 [shape = 'u32[72,128]{1,0:T(1,128)}', space=vmem, size = 0x9000, scoped, tag = 'internal scratch']
  %s0 = inlined_call_operand.vmem [shape: f32[2,8,32], index: 0, kind: input, shape index: {}]
  %s1 = inlined_call_operand.vmem [shape: f32[2,1,8], index: 1, kind: input, shape index: {}]
  %s2 = inlined_call_operand.vmem [shape: f32[2,32], index: 2, kind: input, shape index: {}]
  %s3 = inlined_call_operand.vmem [shape: bf16[2,6,32,16], index: 3, kind: input, shape index: {}]
  %s4 = inlined_call_operand.vmem [shape: f32[2,6,16], index: 4, kind: input, shape index: {}]
  %s5 = inlined_call_operand.vmem [shape: bf16[2,2,16,32], index: 5, kind: input, shape index: {}]
  %s6 = inlined_call_operand.vmem [shape: bf16[2,32,64], index: 6, kind: input, shape index: {}]
  %s7 = inlined_call_operand.vmem [shape: f32[2,1,64], index: 7, kind: input, shape index: {}]
  %s8 = inlined_call_operand.vmem [shape: bf16[2,64,32], index: 8, kind: input, shape index: {}]
  %s9 = inlined_call_operand.vmem [shape: f32[2,6,32], index: 9, kind: input, shape index: {}]
  %s10 = inlined_call_operand.hbm [shape: f32[2,8,32], index: 10, kind: output, shape index: {}]
  %s11 = sld [smem:[#allocation0]]
  $region77: #{pretrained_language_model_forward.1} parent=0
    _
  %s13 = ssub.s32 1, %s11
  %s14 = scalar_select 0, %s13, %s11
  $region1: #{pretrained_language_model_forward.1} parent=0
    #allocation2 [shape = 'u8[8192]{0}', space=vmem, size = 0x2000, scoped, tag = 'output window, operand 0']
    #allocation3 [shape = 's32[2]{0}', space=sflag, size = 0x8, scoped, tag = 'scoped memory for pretrained_language_model_forward.1']
    %15 = vsyncpa [#allocation3], 0
    %s16 = scalar_lea.sflag [#allocation3], 1
    %17 = vsyncpa %s16, 0
    loop: start=0, step=1, limit=6
    $region2: #{pretrained_language_model_forward.1} parent=1 // loop_pre_header
      _
    $region3: #{pretrained_language_model_forward.1} parent=1 // loop_header
      %s19 = sphi 0, %s23
      %p20 = scmp.ge.s32.totalorder %s19, 6
      %s26 = sphi 0, %s38
      %s27 = sphi 0, %s34
      %s28 = sphi 0, %s26
      %s29 = sphi 0, %s27
      %s30 = sphi 0, %s28
      %s31 = sphi 0, %s29
      %s41 = sphi 0, %s43
      %s44 = sphi 0, %s41
      %s45 = sphi 0, %s44
      %s61 = sphi 0, %s45
      %s67 = sphi 0, %s69
      %s70 = sphi 0, %s67
      %s71 = sphi 0, %s70
      %s87 = sphi 0, %s71
      %s91 = sphi 0, %s91
      %s93 = sphi 0, %s91
      %s94 = sphi 0, %s93
      %s108 = sphi 0, %s94
      %s114 = sphi 0, %s116
      %s117 = sphi 0, %s114
      %s118 = sphi 0, %s117
      %s134 = sphi 0, %s118
      %s140 = sphi 0, %s142
      %s143 = sphi 0, %s140
      %s144 = sphi 0, %s143
      %s160 = sphi 0, %s144
      %s166 = sphi 0, %s168
      %s169 = sphi 0, %s166
      %s170 = sphi 0, %s169
      %s186 = sphi 0, %s170
      %s192 = sphi 0, %s194
      %s195 = sphi 0, %s192
      %s196 = sphi 0, %s195
      %s212 = sphi 0, %s196
      %s218 = sphi 0, %s220
      %s221 = sphi 0, %s218
      %s222 = sphi 0, %s221
      %s238 = sphi 0, %s222
      %s244 = sphi 0, %s246
      %s247 = sphi 0, %s244
      %s248 = sphi 0, %s247
      %s264 = sphi 0, %s248
      %s270 = sphi 0, %s272
      %s273 = sphi 0, %s270
      %s274 = sphi 0, %s273
      %s290 = sphi 0, %s274
      %s296 = sphi 0, %s298
      %s299 = sphi 0, %s296
      %s300 = sphi 0, %s299
      %s316 = sphi 0, %s300
    $region4: #{pretrained_language_model_forward.1} parent=1 // loop_header_branch
      %22 = sbr.rel (%p20) target = $region8
    $region5: #{pretrained_language_model_forward.1} parent=1 // loop_body
      %s24 = ssub.s32 %s19, 1
      %s25 = ssub.s32 %s19, 2
      %s32 = sadd.s32 1, %s27
      %p33 = scmp.ge.s32.totalorder %s32, 2
      %s34 = scalar_select %p33, 0, %s32
      %s35 = sadd.s32 1, %s26
      %s36 = scalar_select %p33, %s35, %s26
      %p37 = scmp.ge.s32.totalorder %s36, 2
      %s38 = scalar_select %p37, 0, %s36
      %s39 = ssub.s32 %s26, %s38
      %p40 = scmp.eq.s32.totalorder %s39, 0
      %s42 = sadd.s32 %s41, 1
      %s43 = scalar_select %p40, %s41, %s42
      %p46 = pneg %p40
      %p47 = scmp.eq.s32.totalorder %s19, 3
      %p48 = por %p46, %p47
      %p49 = scmp.ne.s32.totalorder %s41, %s44
      %p50 = scmp.eq.s32.totalorder %s19, 0
      %p51 = por %p49, %p50
      %p52 = scmp.ne.s32.totalorder %s41, %s44
      %p53 = scmp.eq.s32.totalorder %s24, 3
      %p54 = por %p52, %p53
      %p55 = scmp.ne.s32.totalorder %s44, %s45
      %p56 = scmp.eq.s32.totalorder %s24, 0
      %p57 = por %p55, %p56
      %p58 = scmp.ne.s32.totalorder %s44, %s45
      %p59 = scmp.eq.s32.totalorder %s25, 3
      %p60 = por %p58, %p59
      %p62 = scmp.ne.s32.totalorder %s45, %s61
      %p63 = scmp.eq.s32.totalorder %s25, 0
      %p64 = por %p62, %p63
      %s65 = ssub.s32 %s26, %s38
      %p66 = scmp.eq.s32.totalorder %s65, 0
      %s68 = sadd.s32 %s67, 1
      %s69 = scalar_select %p66, %s67, %s68
      %p72 = pneg %p66
      %p73 = scmp.eq.s32.totalorder %s19, 3
      %p74 = por %p72, %p73
      %p75 = scmp.ne.s32.totalorder %s67, %s70
      %p76 = scmp.eq.s32.totalorder %s19, 0
      %p77 = por %p75, %p76
      %p78 = scmp.ne.s32.totalorder %s67, %s70
      %p79 = scmp.eq.s32.totalorder %s24, 3
      %p80 = por %p78, %p79
      %p81 = scmp.ne.s32.totalorder %s70, %s71
      %p82 = scmp.eq.s32.totalorder %s24, 0
      %p83 = por %p81, %p82
      %p84 = scmp.ne.s32.totalorder %s70, %s71
      %p85 = scmp.eq.s32.totalorder %s25, 3
      %p86 = por %p84, %p85
      %p88 = scmp.ne.s32.totalorder %s71, %s87
      %p89 = scmp.eq.s32.totalorder %s25, 0
      %p90 = por %p88, %p89
      %s92 = sadd.s32 %s91, 1
      %p95 = scmp.eq.s32.totalorder %s19, 3
      %p96 = scmp.ne.s32.totalorder %s91, %s93
      %p97 = scmp.eq.s32.totalorder %s19, 0
      %p98 = por %p96, %p97
      %p99 = scmp.ne.s32.totalorder %s91, %s93
      %p100 = scmp.eq.s32.totalorder %s24, 3
      %p101 = por %p99, %p100
      %p102 = scmp.ne.s32.totalorder %s93, %s94
      %p103 = scmp.eq.s32.totalorder %s24, 0
      %p104 = por %p102, %p103
      %p105 = scmp.ne.s32.totalorder %s93, %s94
      %p106 = scmp.eq.s32.totalorder %s25, 3
      %p107 = por %p105, %p106
      %p109 = scmp.ne.s32.totalorder %s94, %s108
      %p110 = scmp.eq.s32.totalorder %s25, 0
      %p111 = por %p109, %p110
      %s112 = ssub.s32 %s27, %s34
      %p113 = scmp.eq.s32.totalorder %s112, 0
      %s115 = sadd.s32 %s114, 1
      %s116 = scalar_select %p113, %s114, %s115
      %p119 = pneg %p113
      %p120 = scmp.eq.s32.totalorder %s19, 3
      %p121 = por %p119, %p120
      %p122 = scmp.ne.s32.totalorder %s114, %s117
      %p123 = scmp.eq.s32.totalorder %s19, 0
      %p124 = por %p122, %p123
      %p125 = scmp.ne.s32.totalorder %s114, %s117
      %p126 = scmp.eq.s32.totalorder %s24, 3
      %p127 = por %p125, %p126
      %p128 = scmp.ne.s32.totalorder %s117, %s118
      %p129 = scmp.eq.s32.totalorder %s24, 0
      %p130 = por %p128, %p129
      %p131 = scmp.ne.s32.totalorder %s117, %s118
      %p132 = scmp.eq.s32.totalorder %s25, 3
      %p133 = por %p131, %p132
      %p135 = scmp.ne.s32.totalorder %s118, %s134
      %p136 = scmp.eq.s32.totalorder %s25, 0
      %p137 = por %p135, %p136
      %s138 = ssub.s32 %s27, %s34
      %p139 = scmp.eq.s32.totalorder %s138, 0
      %s141 = sadd.s32 %s140, 1
      %s142 = scalar_select %p139, %s140, %s141
      %p145 = pneg %p139
      %p146 = scmp.eq.s32.totalorder %s19, 3
      %p147 = por %p145, %p146
      %p148 = scmp.ne.s32.totalorder %s140, %s143
      %p149 = scmp.eq.s32.totalorder %s19, 0
      %p150 = por %p148, %p149
      %p151 = scmp.ne.s32.totalorder %s140, %s143
      %p152 = scmp.eq.s32.totalorder %s24, 3
      %p153 = por %p151, %p152
      %p154 = scmp.ne.s32.totalorder %s143, %s144
      %p155 = scmp.eq.s32.totalorder %s24, 0
      %p156 = por %p154, %p155
      %p157 = scmp.ne.s32.totalorder %s143, %s144
      %p158 = scmp.eq.s32.totalorder %s25, 3
      %p159 = por %p157, %p158
      %p161 = scmp.ne.s32.totalorder %s144, %s160
      %p162 = scmp.eq.s32.totalorder %s25, 0
      %p163 = por %p161, %p162
      %s164 = ssub.s32 %s27, %s34
      %p165 = scmp.eq.s32.totalorder %s164, 0
      %s167 = sadd.s32 %s166, 1
      %s168 = scalar_select %p165, %s166, %s167
      %p171 = pneg %p165
      %p172 = scmp.eq.s32.totalorder %s19, 3
      %p173 = por %p171, %p172
      %p174 = scmp.ne.s32.totalorder %s166, %s169
      %p175 = scmp.eq.s32.totalorder %s19, 0
      %p176 = por %p174, %p175
      %p177 = scmp.ne.s32.totalorder %s166, %s169
      %p178 = scmp.eq.s32.totalorder %s24, 3
      %p179 = por %p177, %p178
      %p180 = scmp.ne.s32.totalorder %s169, %s170
      %p181 = scmp.eq.s32.totalorder %s24, 0
      %p182 = por %p180, %p181
      %p183 = scmp.ne.s32.totalorder %s169, %s170
      %p184 = scmp.eq.s32.totalorder %s25, 3
      %p185 = por %p183, %p184
      %p187 = scmp.ne.s32.totalorder %s170, %s186
      %p188 = scmp.eq.s32.totalorder %s25, 0
      %p189 = por %p187, %p188
      %s190 = ssub.s32 %s27, %s34
      %p191 = scmp.eq.s32.totalorder %s190, 0
      %s193 = sadd.s32 %s192, 1
      %s194 = scalar_select %p191, %s192, %s193
      %p197 = pneg %p191
      %p198 = scmp.eq.s32.totalorder %s19, 3
      %p199 = por %p197, %p198
      %p200 = scmp.ne.s32.totalorder %s192, %s195
      %p201 = scmp.eq.s32.totalorder %s19, 0
      %p202 = por %p200, %p201
      %p203 = scmp.ne.s32.totalorder %s192, %s195
      %p204 = scmp.eq.s32.totalorder %s24, 3
      %p205 = por %p203, %p204
      %p206 = scmp.ne.s32.totalorder %s195, %s196
      %p207 = scmp.eq.s32.totalorder %s24, 0
      %p208 = por %p206, %p207
      %p209 = scmp.ne.s32.totalorder %s195, %s196
      %p210 = scmp.eq.s32.totalorder %s25, 3
      %p211 = por %p209, %p210
      %p213 = scmp.ne.s32.totalorder %s196, %s212
      %p214 = scmp.eq.s32.totalorder %s25, 0
      %p215 = por %p213, %p214
      %s216 = ssub.s32 %s27, %s34
      %p217 = scmp.eq.s32.totalorder %s216, 0
      %s219 = sadd.s32 %s218, 1
      %s220 = scalar_select %p217, %s218, %s219
      %p223 = pneg %p217
      %p224 = scmp.eq.s32.totalorder %s19, 3
      %p225 = por %p223, %p224
      %p226 = scmp.ne.s32.totalorder %s218, %s221
      %p227 = scmp.eq.s32.totalorder %s19, 0
      %p228 = por %p226, %p227
      %p229 = scmp.ne.s32.totalorder %s218, %s221
      %p230 = scmp.eq.s32.totalorder %s24, 3
      %p231 = por %p229, %p230
      %p232 = scmp.ne.s32.totalorder %s221, %s222
      %p233 = scmp.eq.s32.totalorder %s24, 0
      %p234 = por %p232, %p233
      %p235 = scmp.ne.s32.totalorder %s221, %s222
      %p236 = scmp.eq.s32.totalorder %s25, 3
      %p237 = por %p235, %p236
      %p239 = scmp.ne.s32.totalorder %s222, %s238
      %p240 = scmp.eq.s32.totalorder %s25, 0
      %p241 = por %p239, %p240
      %s242 = ssub.s32 %s27, %s34
      %p243 = scmp.eq.s32.totalorder %s242, 0
      %s245 = sadd.s32 %s244, 1
      %s246 = scalar_select %p243, %s244, %s245
      %p249 = pneg %p243
      %p250 = scmp.eq.s32.totalorder %s19, 3
      %p251 = por %p249, %p250
      %p252 = scmp.ne.s32.totalorder %s244, %s247
      %p253 = scmp.eq.s32.totalorder %s19, 0
      %p254 = por %p252, %p253
      %p255 = scmp.ne.s32.totalorder %s244, %s247
      %p256 = scmp.eq.s32.totalorder %s24, 3
      %p257 = por %p255, %p256
      %p258 = scmp.ne.s32.totalorder %s247, %s248
      %p259 = scmp.eq.s32.totalorder %s24, 0
      %p260 = por %p258, %p259
      %p261 = scmp.ne.s32.totalorder %s247, %s248
      %p262 = scmp.eq.s32.totalorder %s25, 3
      %p263 = por %p261, %p262
      %p265 = scmp.ne.s32.totalorder %s248, %s264
      %p266 = scmp.eq.s32.totalorder %s25, 0
      %p267 = por %p265, %p266
      %s268 = ssub.s32 %s27, %s34
      %p269 = scmp.eq.s32.totalorder %s268, 0
      %s271 = sadd.s32 %s270, 1
      %s272 = scalar_select %p269, %s270, %s271
      %p275 = pneg %p269
      %p276 = scmp.eq.s32.totalorder %s19, 3
      %p277 = por %p275, %p276
      %p278 = scmp.ne.s32.totalorder %s270, %s273
      %p279 = scmp.eq.s32.totalorder %s19, 0
      %p280 = por %p278, %p279
      %p281 = scmp.ne.s32.totalorder %s270, %s273
      %p282 = scmp.eq.s32.totalorder %s24, 3
      %p283 = por %p281, %p282
      %p284 = scmp.ne.s32.totalorder %s273, %s274
      %p285 = scmp.eq.s32.totalorder %s24, 0
      %p286 = por %p284, %p285
      %p287 = scmp.ne.s32.totalorder %s273, %s274
      %p288 = scmp.eq.s32.totalorder %s25, 3
      %p289 = por %p287, %p288
      %p291 = scmp.ne.s32.totalorder %s274, %s290
      %p292 = scmp.eq.s32.totalorder %s25, 0
      %p293 = por %p291, %p292
      %s294 = ssub.s32 %s26, %s38
      %p295 = scmp.eq.s32.totalorder %s294, 0
      %s297 = sadd.s32 %s296, 1
      %s298 = scalar_select %p295, %s296, %s297
      %p301 = pneg %p295
      %p302 = scmp.eq.s32.totalorder %s19, 3
      %p303 = por %p301, %p302
      %p304 = scmp.ne.s32.totalorder %s296, %s299
      %p305 = scmp.eq.s32.totalorder %s19, 0
      %p306 = por %p304, %p305
      %p307 = scmp.ne.s32.totalorder %s296, %s299
      %p308 = scmp.eq.s32.totalorder %s24, 3
      %p309 = por %p307, %p308
      %p310 = scmp.ne.s32.totalorder %s299, %s300
      %p311 = scmp.eq.s32.totalorder %s24, 0
      %p312 = por %p310, %p311
      %p313 = scmp.ne.s32.totalorder %s299, %s300
      %p314 = scmp.eq.s32.totalorder %s25, 3
      %p315 = por %p313, %p314
      %p317 = scmp.ne.s32.totalorder %s300, %s316
      %p318 = scmp.eq.s32.totalorder %s25, 0
      %p319 = por %p317, %p318
      %p320 = scmp.le.s32.totalorder 1, %s19
      %p321 = scmp.lt.s32.totalorder %s19, 5
      %p322 = pnand %p320, %p321
      %p323 = pneg %p322
      // Predicated region
      $region9: #{pretrained_language_model_forward.1} parent=5 // pred_check
        _
      $region10: #{pretrained_language_model_forward.1} parent=5 // pred_check_branch
        %325 = sbr.rel (%p322) target = $region12
      $region11: #{pretrained_language_model_forward.1} parent=5 // pred_region
        %s326 = ssub.s32 %s19, 1
        // Predicated region
        $region13: #{pretrained_language_model_forward.1} parent=11 // pred_check
          %p327 = pneg %p104
        $region14: #{pretrained_language_model_forward.1} parent=11 // pred_check_branch
          %329 = sbr.rel (%p327) target = $region16
        $region15: #{pretrained_language_model_forward.1} parent=11 // pred_region
          _
        $region16: #{pretrained_language_model_forward.1} parent=11 // pred_fallthru
          _
      $region12: #{pretrained_language_model_forward.1} parent=5 // pred_fallthru
        _
      %p330 = scmp.lt.s32.totalorder %s19, 4
      // Predicated region
      $region17: #{pretrained_language_model_forward.1} parent=5 // pred_check
        %p331 = pneg %p330
      $region18: #{pretrained_language_model_forward.1} parent=5 // pred_check_branch
        %333 = sbr.rel (%p331) target = $region20
      $region19: #{pretrained_language_model_forward.1} parent=5 // pred_region
        // Predicated region
        $region21: #{pretrained_language_model_forward.1} parent=19 // pred_check
          %p334 = pneg %p51
        $region22: #{pretrained_language_model_forward.1} parent=19 // pred_check_branch
          %336 = sbr.rel (%p334) target = $region24
        $region23: #{pretrained_language_model_forward.1} parent=19 // pred_region
          %p337 = scmp.lt.s32.totalorder %s26, 1
          %s338 = scalar_select %p337, %s26, 1
          %s339 = smul.addr %s338, 8
          %s340 = scalar_lea.vmem %s0, %s339
        $region24: #{pretrained_language_model_forward.1} parent=19 // pred_fallthru
          _
        // Predicated region
        $region25: #{pretrained_language_model_forward.1} parent=19 // pred_check
          %p341 = pneg %p77
        $region26: #{pretrained_language_model_forward.1} parent=19 // pred_check_branch
          %343 = sbr.rel (%p341) target = $region28
        $region27: #{pretrained_language_model_forward.1} parent=19 // pred_region
          %p344 = scmp.lt.s32.totalorder %s26, 1
          %s345 = scalar_select %p344, %s26, 1
          %s346 = scalar_lea.vmem %s1, %s345
        $region28: #{pretrained_language_model_forward.1} parent=19 // pred_fallthru
          _
        // Predicated region
        $region29: #{pretrained_language_model_forward.1} parent=19 // pred_check
          %p347 = pneg %p124
        $region30: #{pretrained_language_model_forward.1} parent=19 // pred_check_branch
          %349 = sbr.rel (%p347) target = $region32
        $region31: #{pretrained_language_model_forward.1} parent=19 // pred_region
          %p350 = scmp.lt.s32.totalorder %s27, 1
          %s351 = scalar_select %p350, %s27, 1
          %s352 = smul.addr %s351, 24
          %s353 = smul.addr %s352, 4
          %s354 = scalar_lea.vmem %s3, %s353
        $region32: #{pretrained_language_model_forward.1} parent=19 // pred_fallthru
          _
        // Predicated region
        $region33: #{pretrained_language_model_forward.1} parent=19 // pred_check
          %p355 = pneg %p150
        $region34: #{pretrained_language_model_forward.1} parent=19 // pred_check_branch
          %357 = sbr.rel (%p355) target = $region36
        $region35: #{pretrained_language_model_forward.1} parent=19 // pred_region
          %p358 = scmp.lt.s32.totalorder %s27, 1
          %s359 = scalar_select %p358, %s27, 1
          %s360 = smul.addr %s359, 8
          %s361 = scalar_lea.vmem %s4, %s360
        $region36: #{pretrained_language_model_forward.1} parent=19 // pred_fallthru
          _
        // Predicated region
        $region37: #{pretrained_language_model_forward.1} parent=19 // pred_check
          %p362 = pneg %p176
        $region38: #{pretrained_language_model_forward.1} parent=19 // pred_check_branch
          %364 = sbr.rel (%p362) target = $region40
        $region39: #{pretrained_language_model_forward.1} parent=19 // pred_region
          %p365 = scmp.lt.s32.totalorder %s27, 1
          %s366 = scalar_select %p365, %s27, 1
          %s367 = smul.addr %s366, 4
          %s368 = smul.addr %s367, 4
          %s369 = scalar_lea.vmem %s5, %s368
        $region40: #{pretrained_language_model_forward.1} parent=19 // pred_fallthru
          _
        // Predicated region
        $region41: #{pretrained_language_model_forward.1} parent=19 // pred_check
          %p370 = pneg %p202
        $region42: #{pretrained_language_model_forward.1} parent=19 // pred_check_branch
          %372 = sbr.rel (%p370) target = $region44
        $region43: #{pretrained_language_model_forward.1} parent=19 // pred_region
          %p373 = scmp.lt.s32.totalorder %s27, 1
          %s374 = scalar_select %p373, %s27, 1
          %s375 = smul.addr %s374, 4
          %s376 = smul.addr %s375, 4
          %s377 = scalar_lea.vmem %s6, %s376
        $region44: #{pretrained_language_model_forward.1} parent=19 // pred_fallthru
          _
        // Predicated region
        $region45: #{pretrained_language_model_forward.1} parent=19 // pred_check
          %p378 = pneg %p228
        $region46: #{pretrained_language_model_forward.1} parent=19 // pred_check_branch
          %380 = sbr.rel (%p378) target = $region48
        $region47: #{pretrained_language_model_forward.1} parent=19 // pred_region
          %p381 = scmp.lt.s32.totalorder %s27, 1
          %s382 = scalar_select %p381, %s27, 1
          %s383 = scalar_lea.vmem %s7, %s382
        $region48: #{pretrained_language_model_forward.1} parent=19 // pred_fallthru
          _
        // Predicated region
        $region49: #{pretrained_language_model_forward.1} parent=19 // pred_check
          %p384 = pneg %p254
        $region50: #{pretrained_language_model_forward.1} parent=19 // pred_check_branch
          %386 = sbr.rel (%p384) target = $region52
        $region51: #{pretrained_language_model_forward.1} parent=19 // pred_region
          %p387 = scmp.lt.s32.totalorder %s27, 1
          %s388 = scalar_select %p387, %s27, 1
          %s389 = smul.addr %s388, 8
          %s390 = smul.addr %s389, 4
          %s391 = scalar_lea.vmem %s8, %s390
        $region52: #{pretrained_language_model_forward.1} parent=19 // pred_fallthru
          _
        // Predicated region
        $region53: #{pretrained_language_model_forward.1} parent=19 // pred_check
          %p392 = pneg %p280
        $region54: #{pretrained_language_model_forward.1} parent=19 // pred_check_branch
          %394 = sbr.rel (%p392) target = $region56
        $region55: #{pretrained_language_model_forward.1} parent=19 // pred_region
          %p395 = scmp.lt.s32.totalorder %s27, 1
          %s396 = scalar_select %p395, %s27, 1
          %s397 = smul.addr %s396, 8
          %s398 = scalar_lea.vmem %s9, %s397
        $region56: #{pretrained_language_model_forward.1} parent=19 // pred_fallthru
          _
      $region20: #{pretrained_language_model_forward.1} parent=5 // pred_fallthru
        _
      %p399 = scmp.le.s32.totalorder 1, %s19
      %p400 = scmp.lt.s32.totalorder %s19, 5
      %p401 = pnand %p399, %p400
      %p402 = pneg %p401
      // Predicated region
      $region57: #{pretrained_language_model_forward.1} parent=5 // pred_check
        _
      $region58: #{pretrained_language_model_forward.1} parent=5 // pred_check_branch
        %404 = sbr.rel (%p401) target = $region60
      $region59: #{pretrained_language_model_forward.1} parent=5 // pred_region
        %s405 = ssub.s32 %s19, 1
        %p406 = scmp.lt.s32.totalorder %s28, 1
        %s407 = scalar_select %p406, %s28, 1
        %s408 = smul.addr %s407, 8
        %s409 = scalar_lea.vmem %s0, %s408
        %p410 = pneg %p57
        %p411 = pneg %p54
        %p412 = scmp.lt.s32.totalorder %s28, 1
        %s413 = scalar_select %p412, %s28, 1
        %s414 = scalar_lea.vmem %s1, %s413
        %p415 = pneg %p83
        %p416 = pneg %p80
        %p417 = pneg %p104
        %p418 = pneg %p101
        %p419 = scmp.lt.s32.totalorder %s29, 1
        %s420 = scalar_select %p419, %s29, 1
        %s421 = smul.addr %s420, 24
        %s422 = smul.addr %s421, 4
        %s423 = scalar_lea.vmem %s3, %s422
        %p424 = pneg %p130
        %p425 = pneg %p127
        %p426 = scmp.lt.s32.totalorder %s29, 1
        %s427 = scalar_select %p426, %s29, 1
        %s428 = smul.addr %s427, 8
        %s429 = scalar_lea.vmem %s4, %s428
        %p430 = pneg %p156
        %p431 = pneg %p153
        %p432 = scmp.lt.s32.totalorder %s29, 1
        %s433 = scalar_select %p432, %s29, 1
        %s434 = smul.addr %s433, 4
        %s435 = smul.addr %s434, 4
        %s436 = scalar_lea.vmem %s5, %s435
        %p437 = pneg %p182
        %p438 = pneg %p179
        %p439 = scmp.lt.s32.totalorder %s29, 1
        %s440 = scalar_select %p439, %s29, 1
        %s441 = smul.addr %s440, 4
        %s442 = smul.addr %s441, 4
        %s443 = scalar_lea.vmem %s6, %s442
        %p444 = pneg %p208
        %p445 = pneg %p205
        %p446 = scmp.lt.s32.totalorder %s29, 1
        %s447 = scalar_select %p446, %s29, 1
        %s448 = scalar_lea.vmem %s7, %s447
        %p449 = pneg %p234
        %p450 = pneg %p231
        %p451 = scmp.lt.s32.totalorder %s29, 1
        %s452 = scalar_select %p451, %s29, 1
        %s453 = smul.addr %s452, 8
        %s454 = smul.addr %s453, 4
        %s455 = scalar_lea.vmem %s8, %s454
        %p456 = pneg %p260
        %p457 = pneg %p257
        %p458 = scmp.lt.s32.totalorder %s29, 1
        %s459 = scalar_select %p458, %s29, 1
        %s460 = smul.addr %s459, 8
        %s461 = scalar_lea.vmem %s9, %s460
        %p462 = pneg %p286
        %p463 = pneg %p283
        %p464 = pneg %p312
        %p465 = pneg %p309
        %s466 = sand.u32 %s299, 1
        %s467 = scalar_lea.sflag [#allocation3], %s466
        %s468 = sand.u32 %s299, 1
        %s469 = smul.addr %s468, 8
        %s470 = scalar_lea.vmem [#allocation2], %s469
        %p471 = scmp.lt.s32.totalorder %s28, 1
        %s472 = scalar_select %p471, %s28, 1
        %s473 = smul.addr %s472, 8
        %s474 = scalar_lea.vmem %s0, %s473
        %p475 = scmp.lt.s32.totalorder %s28, 1
        %s476 = scalar_select %p475, %s28, 1
        %s477 = scalar_lea.vmem %s1, %s476
        %p478 = scmp.lt.s32.totalorder %s29, 1
        %s479 = scalar_select %p478, %s29, 1
        %s480 = smul.addr %s479, 24
        %s481 = smul.addr %s480, 4
        %s482 = scalar_lea.vmem %s3, %s481
        %p483 = scmp.lt.s32.totalorder %s29, 1
        %s484 = scalar_select %p483, %s29, 1
        %s485 = smul.addr %s484, 8
        %s486 = scalar_lea.vmem %s4, %s485
        %p487 = scmp.lt.s32.totalorder %s29, 1
        %s488 = scalar_select %p487, %s29, 1
        %s489 = smul.addr %s488, 4
        %s490 = smul.addr %s489, 4
        %s491 = scalar_lea.vmem %s5, %s490
        %p492 = scmp.lt.s32.totalorder %s29, 1
        %s493 = scalar_select %p492, %s29, 1
        %s494 = smul.addr %s493, 4
        %s495 = smul.addr %s494, 4
        %s496 = scalar_lea.vmem %s6, %s495
        %p497 = scmp.lt.s32.totalorder %s29, 1
        %s498 = scalar_select %p497, %s29, 1
        %s499 = scalar_lea.vmem %s7, %s498
        %p500 = scmp.lt.s32.totalorder %s29, 1
        %s501 = scalar_select %p500, %s29, 1
        %s502 = smul.addr %s501, 8
        %s503 = smul.addr %s502, 4
        %s504 = scalar_lea.vmem %s8, %s503
        %p505 = scmp.lt.s32.totalorder %s29, 1
        %s506 = scalar_select %p505, %s29, 1
        %s507 = smul.addr %s506, 8
        %s508 = scalar_lea.vmem %s9, %s507
        %p510 = scmp.eq.s32.totalorder %s29, 0
        // Predicated region
        $region61: #{pretrained_language_model_forward.1} parent=59 // pred_check
          %p511 = pneg %p510
        $region62: #{pretrained_language_model_forward.1} parent=59 // pred_check_branch
          %513 = sbr.rel (%p511) target = $region64
        $region63: #{pretrained_language_model_forward.1} parent=59 // pred_region
          %v514 = vld [vmem:[%s2] sm:$0x3]
          %v515 = vld [vmem:[%s474] sm:$0xff]
          %vm516 = vcmask 261120
          %v517 = vsel %vm516, %v515, 0.0
          %518 = vadd.xlane.f32.xlu0 %v517
          %v519 = vpop.xlane.xlu0 %518
          %v520 = vrcp.pop 32.0
          %v521 = vmul.f32 32.0, %v520
          %v522 = vsub.f32 1.0, %v521
          %v523 = vmul.f32 %v520, %v522
          %v524 = vadd.f32 %v520, %v523
          %vm525 = vweird.f32 %v520
          %v526 = vsel %vm525, %v520, %v524
          %v527 = vmul.f32 %v519, %v526
          %v528 = vsub.f32 %v515, %v527
          %v529 = vmul.f32 %v528, %v528
          %v530 = vsel %vm516, %v529, 0.0
          %531 = vadd.xlane.f32.xlu0 %v530
          %v532 = vpop.xlane.xlu0 %531
          %v533 = vmul.f32 %v532, %v526
          %v534 = vadd.f32 %v533, 1e-12
          %v535 = vrsqrt.pop %v534
          %v536 = vmul.f32 %v535, %v534
          %v537 = vmul.f32 %v536, %v535
          %v538 = vmul.f32 0.5, %v537
          %v539 = vsub.f32 1.5, %v538
          %v540 = vmul.f32 %v535, %v539
          %vm541 = vweird.f32 %v534
          %vm542 = vweird.f32 %v535
          %vm543 = vmor %vm541, %vm542
          %v544 = vsel %vm543, %v535, %v540
          %v545 = vmul.f32 %v528, %v544
          %v546 = vperm.slane %v514, 0
          %v547 = vmul.f32 %v545, %v546
          %v548 = vperm.slane %v514, 1
          %v549 = vadd.f32 %v547, %v548
          %550 = vst.msk [vmem:[%s470] sm:$0xff] %vm516, %v549
        $region64: #{pretrained_language_model_forward.1} parent=59 // pred_fallthru
          _
        %v551 = vld [vmem:[%s470] sm:$0xff]
        %v552 = vld [vmem:[%s477] sm:$0x1]
        %v553 = vld [vmem:[%s508] sm:$0x3f]
        %v554 = vld [vmem:[%s486] sm:$0x3f]
        %v555 = vpack.c.bf16 %v551, %v551
        %v556 = vld [vmem:[%s482] sm:$0xf]
        %v557 = vld [vmem:[%s482 + $0x4] sm:$0xf]
        %v558 = vld [vmem:[%s482 + $0x8] sm:$0xf]
        %v559 = vld [vmem:[%s482 + $0xc] sm:$0xf]
        %s560 = scalar_lea.vmem %s482, 16
        %v561 = vld [vmem:[%s560] sm:$0xf]
        %v562 = vld [vmem:[%s560 + $0x4] sm:$0xf]
        %v563 = vld [vmem:[%s560 + $0x8] sm:$0xf]
        %v564 = vld [vmem:[%s560 + $0xc] sm:$0xf]
        %s565 = scalar_lea.vmem %s482, 32
        %v566 = vld [vmem:[%s565] sm:$0xf]
        %v567 = vld [vmem:[%s565 + $0x4] sm:$0xf]
        %v568 = vld [vmem:[%s565 + $0x8] sm:$0xf]
        %v569 = vld [vmem:[%s565 + $0xc] sm:$0xf]
        %v570 = vperm.slane %v554, 0
        %v575 = vunpack.c.l.b16 %v556
        %v576 = vunpack.c.l.b16 %v557
        %v577 = vunpack.c.l.b16 %v558
        %v578 = vunpack.c.l.b16 %v559
        %v579 = vpack.c.b16 %v576, %v575
        %v580 = vpack.c.b16 %v578, %v577
        %vm583 = vcmask 261120
        %v585 = vsel %vm583, %v555, 0
        %587 = vmatpush.bf16.msra.mxu0 0
        %588 = vmatpush.bf16.msra.mxu0 0
        %589 = vmatpush.bf16.msra.mxu0 0
        %590 = vmatpush.bf16.msra.mxu0 0
        %591 = vmatpush.bf16.msra.mxu0 0
        %592 = vmatpush.bf16.msra.mxu0 0
        %593 = vmatpush.bf16.msra.mxu0 %v580
        %594 = vmatpush.bf16.msra.mxu0 %v579
        %595 = vmatmul.bf16.gmra.mxu0 %v585
        %v596 = vpop.f32.mrf.mxu0
        %v597 = vadd.f32 %v570, %v596
        %v598 = vpop.f32.mrf.mxu0
        %599 = vdwg.mxu0
        %v600 = vperm.slane %v554, 1
        %v605 = vunpack.c.l.b16 %v561
        %v606 = vunpack.c.l.b16 %v562
        %v607 = vunpack.c.l.b16 %v563
        %v608 = vunpack.c.l.b16 %v564
        %v609 = vpack.c.b16 %v606, %v605
        %v610 = vpack.c.b16 %v608, %v607
        %613 = vmatpush.bf16.msra.mxu0 0
        %614 = vmatpush.bf16.msra.mxu0 0
        %615 = vmatpush.bf16.msra.mxu0 0
        %616 = vmatpush.bf16.msra.mxu0 0
        %617 = vmatpush.bf16.msra.mxu0 0
        %618 = vmatpush.bf16.msra.mxu0 0
        %619 = vmatpush.bf16.msra.mxu0 %v610
        %620 = vmatpush.bf16.msra.mxu0 %v609
        %621 = vmatmul.bf16.gmra.mxu0 %v585
        %v622 = vpop.f32.mrf.mxu0
        %v623 = vadd.f32 %v600, %v622
        %v624 = vpop.f32.mrf.mxu0
        %625 = vdwg.mxu0
        %v626 = vperm.slane %v554, 2
        %v631 = vunpack.c.l.b16 %v566
        %v632 = vunpack.c.l.b16 %v567
        %v633 = vunpack.c.l.b16 %v568
        %v634 = vunpack.c.l.b16 %v569
        %v635 = vpack.c.b16 %v632, %v631
        %v636 = vpack.c.b16 %v634, %v633
        %639 = vmatpush.bf16.msra.mxu0 0
        %640 = vmatpush.bf16.msra.mxu0 0
        %641 = vmatpush.bf16.msra.mxu0 0
        %642 = vmatpush.bf16.msra.mxu0 0
        %643 = vmatpush.bf16.msra.mxu0 0
        %644 = vmatpush.bf16.msra.mxu0 0
        %645 = vmatpush.bf16.msra.mxu0 %v636
        %646 = vmatpush.bf16.msra.mxu0 %v635
        %647 = vmatmul.bf16.gmra.mxu0 %v585
        %v648 = vpop.f32.mrf.mxu0
        %v649 = vadd.f32 %v626, %v648
        %v650 = vpop.f32.mrf.mxu0
        %651 = vdwg.mxu0
        %v652 = vpack.c.bf16 %v597, %v597
        %v653 = vpack.c.bf16 %v623, %v623
        %vm654 = vcmask 130048
        %v656 = vsel %vm654, %v652, 0
        %v659 = vsel %vm654, %v653, 0
        %661 = vmatpush.bf16.xpose.msra.mxu0 0
        %662 = vmatpush.bf16.xpose.msra.mxu0 0
        %663 = vmatpush.bf16.xpose.msra.mxu0 0
        %664 = vmatpush.bf16.xpose.msra.mxu0 0
        %665 = vmatpush.bf16.xpose.msra.mxu0 0
        %666 = vmatpush.bf16.xpose.msra.mxu0 0
        %667 = vmatpush.bf16.xpose.msra.mxu0 0
        %668 = vmatpush.bf16.xpose.msra.mxu0 %v659
        %669 = vmatmul.bf16.gmra.mxu0 %v656
        %v670 = vpop.f32.mrf.mxu0
        %v671 = vadd.f32 0.0, %v670
        %v672 = vpop.f32.mrf.mxu0
        %673 = vdwg.mxu0
        %v674 = vmul.f32 %v671, 0.25
        %v676 = vperm.slane %v552, 0
        %v678 = vadd.f32 %v674, %v676
        %vm679 = vcmask 64512
        %v680 = vsel %vm679, %v678, -inf
        %681 = vmax.xlane.f32.xlu0 %v680
        %v682 = vpop.xlane.xlu0 %681
        %v683 = vsub.f32 %v678, %v682
        %v684 = vmul.f32 %v683, 1.442695
        %v685 = vpow.pop %v684
        %v686 = vsel %vm679, %v685, 0.0
        %687 = vadd.xlane.f32.xlu0 %v686
        %v688 = vpop.xlane.xlu0 %687
        %v689 = vrcp.pop %v688
        %v690 = vmul.f32 %v688, %v689
        %v691 = vsub.f32 1.0, %v690
        %v692 = vmul.f32 %v689, %v691
        %v693 = vadd.f32 %v689, %v692
        %vm694 = vweird.f32 %v688
        %vm695 = vweird.f32 %v689
        %vm696 = vmor %vm694, %vm695
        %v697 = vsel %vm696, %v689, %v693
        %v698 = vand.u32 2147483647, %v688
        %vm699 = vcmp.eq.f32.partialorder %v698, 8.507059e+37
        %v700 = vand.u32 %v688, 2147483648
        %v701 = vor.u32 1.1754944e-38, %v700
        %v702 = vsel %vm699, %v701, %v697
        %v703 = vmul.f32 %v685, %v702
        %v704 = vpack.c.bf16 %v703, %v703
        %v705 = vpack.c.bf16 %v649, %v649
        %v707 = vsel %vm679, %v704, 0
        %vm709 = vcmask 1043456
        %v711 = vsel %vm709, %v705, 0
        %713 = vmatpush.bf16.msra.mxu0 0
        %714 = vmatpush.bf16.msra.mxu0 0
        %715 = vmatpush.bf16.msra.mxu0 0
        %716 = vmatpush.bf16.msra.mxu0 0
        %717 = vmatpush.bf16.msra.mxu0 0
        %718 = vmatpush.bf16.msra.mxu0 0
        %719 = vmatpush.bf16.msra.mxu0 0
        %720 = vmatpush.bf16.msra.mxu0 %v711
        %721 = vmatmul.bf16.gmra.mxu0 %v707
        %v722 = vpop.f32.mrf.mxu0
        %v723 = vadd.f32 0.0, %v722
        %v724 = vpop.f32.mrf.mxu0
        %725 = vdwg.mxu0
        %v726 = vpack.c.bf16 %v723, %v723
        %v727 = vld [vmem:[%s491] sm:$0xf]
        %v728 = vld [vmem:[%s491 + $0x4] sm:$0xf]
        %s729 = scalar_lea.vmem %s482, 48
        %v730 = vld [vmem:[%s729] sm:$0xf]
        %v731 = vld [vmem:[%s729 + $0x4] sm:$0xf]
        %v732 = vld [vmem:[%s729 + $0x8] sm:$0xf]
        %v733 = vld [vmem:[%s729 + $0xc] sm:$0xf]
        %s734 = scalar_lea.vmem %s482, 64
        %v735 = vld [vmem:[%s734] sm:$0xf]
        %v736 = vld [vmem:[%s734 + $0x4] sm:$0xf]
        %v737 = vld [vmem:[%s734 + $0x8] sm:$0xf]
        %v738 = vld [vmem:[%s734 + $0xc] sm:$0xf]
        %s739 = scalar_lea.vmem %s482, 80
        %v740 = vld [vmem:[%s739] sm:$0xf]
        %v741 = vld [vmem:[%s739 + $0x4] sm:$0xf]
        %v742 = vld [vmem:[%s739 + $0x8] sm:$0xf]
        %v743 = vld [vmem:[%s739 + $0xc] sm:$0xf]
        %v744 = vperm.slane %v554, 3
        %v749 = vunpack.c.l.b16 %v730
        %v750 = vunpack.c.l.b16 %v731
        %v751 = vunpack.c.l.b16 %v732
        %v752 = vunpack.c.l.b16 %v733
        %v753 = vpack.c.b16 %v750, %v749
        %v754 = vpack.c.b16 %v752, %v751
        %757 = vmatpush.bf16.msra.mxu0 0
        %758 = vmatpush.bf16.msra.mxu0 0
        %759 = vmatpush.bf16.msra.mxu0 0
        %760 = vmatpush.bf16.msra.mxu0 0
        %761 = vmatpush.bf16.msra.mxu0 0
        %762 = vmatpush.bf16.msra.mxu0 0
        %763 = vmatpush.bf16.msra.mxu0 %v754
        %764 = vmatpush.bf16.msra.mxu0 %v753
        %765 = vmatmul.bf16.gmra.mxu0 %v585
        %v766 = vpop.f32.mrf.mxu0
        %v767 = vadd.f32 %v744, %v766
        %v768 = vpop.f32.mrf.mxu0
        %769 = vdwg.mxu0
        %v770 = vperm.slane %v554, 4
        %v775 = vunpack.c.l.b16 %v735
        %v776 = vunpack.c.l.b16 %v736
        %v777 = vunpack.c.l.b16 %v737
        %v778 = vunpack.c.l.b16 %v738
        %v779 = vpack.c.b16 %v776, %v775
        %v780 = vpack.c.b16 %v778, %v777
        %783 = vmatpush.bf16.msra.mxu0 0
        %784 = vmatpush.bf16.msra.mxu0 0
        %785 = vmatpush.bf16.msra.mxu0 0
        %786 = vmatpush.bf16.msra.mxu0 0
        %787 = vmatpush.bf16.msra.mxu0 0
        %788 = vmatpush.bf16.msra.mxu0 0
        %789 = vmatpush.bf16.msra.mxu0 %v780
        %790 = vmatpush.bf16.msra.mxu0 %v779
        %791 = vmatmul.bf16.gmra.mxu0 %v585
        %v792 = vpop.f32.mrf.mxu0
        %v793 = vadd.f32 %v770, %v792
        %v794 = vpop.f32.mrf.mxu0
        %795 = vdwg.mxu0
        %v796 = vperm.slane %v554, 5
        %v801 = vunpack.c.l.b16 %v740
        %v802 = vunpack.c.l.b16 %v741
        %v803 = vunpack.c.l.b16 %v742
        %v804 = vunpack.c.l.b16 %v743
        %v805 = vpack.c.b16 %v802, %v801
        %v806 = vpack.c.b16 %v804, %v803
        %809 = vmatpush.bf16.msra.mxu0 0
        %810 = vmatpush.bf16.msra.mxu0 0
        %811 = vmatpush.bf16.msra.mxu0 0
        %812 = vmatpush.bf16.msra.mxu0 0
        %813 = vmatpush.bf16.msra.mxu0 0
        %814 = vmatpush.bf16.msra.mxu0 0
        %815 = vmatpush.bf16.msra.mxu0 %v806
        %816 = vmatpush.bf16.msra.mxu0 %v805
        %817 = vmatmul.bf16.gmra.mxu0 %v585
        %v818 = vpop.f32.mrf.mxu0
        %v819 = vadd.f32 %v796, %v818
        %v820 = vpop.f32.mrf.mxu0
        %821 = vdwg.mxu0
        %v822 = vpack.c.bf16 %v767, %v767
        %v823 = vpack.c.bf16 %v793, %v793
        %v825 = vsel %vm654, %v822, 0
        %v828 = vsel %vm654, %v823, 0
        %830 = vmatpush.bf16.xpose.msra.mxu0 0
        %831 = vmatpush.bf16.xpose.msra.mxu0 0
        %832 = vmatpush.bf16.xpose.msra.mxu0 0
        %833 = vmatpush.bf16.xpose.msra.mxu0 0
        %834 = vmatpush.bf16.xpose.msra.mxu0 0
        %835 = vmatpush.bf16.xpose.msra.mxu0 0
        %836 = vmatpush.bf16.xpose.msra.mxu0 0
        %837 = vmatpush.bf16.xpose.msra.mxu0 %v828
        %838 = vmatmul.bf16.gmra.mxu0 %v825
        %v839 = vpop.f32.mrf.mxu0
        %v840 = vadd.f32 0.0, %v839
        %v841 = vpop.f32.mrf.mxu0
        %842 = vdwg.mxu0
        %v843 = vmul.f32 %v840, 0.25
        %v844 = vadd.f32 %v843, %v676
        %v845 = vsel %vm679, %v844, -inf
        %846 = vmax.xlane.f32.xlu0 %v845
        %v847 = vpop.xlane.xlu0 %846
        %v848 = vsub.f32 %v844, %v847
        %v849 = vmul.f32 %v848, 1.442695
        %v850 = vpow.pop %v849
        %v851 = vsel %vm679, %v850, 0.0
        %852 = vadd.xlane.f32.xlu0 %v851
        %v853 = vpop.xlane.xlu0 %852
        %v854 = vrcp.pop %v853
        %v855 = vmul.f32 %v853, %v854
        %v856 = vsub.f32 1.0, %v855
        %v857 = vmul.f32 %v854, %v856
        %v858 = vadd.f32 %v854, %v857
        %vm859 = vweird.f32 %v853
        %vm860 = vweird.f32 %v854
        %vm861 = vmor %vm859, %vm860
        %v862 = vsel %vm861, %v854, %v858
        %v863 = vand.u32 2147483647, %v853
        %vm864 = vcmp.eq.f32.partialorder %v863, 8.507059e+37
        %v865 = vand.u32 %v853, 2147483648
        %v866 = vor.u32 1.1754944e-38, %v865
        %v867 = vsel %vm864, %v866, %v862
        %v868 = vmul.f32 %v850, %v867
        %v869 = vpack.c.bf16 %v868, %v868
        %v870 = vpack.c.bf16 %v819, %v819
        %v872 = vsel %vm679, %v869, 0
        %v875 = vsel %vm709, %v870, 0
        %877 = vmatpush.bf16.msra.mxu0 0
        %878 = vmatpush.bf16.msra.mxu0 0
        %879 = vmatpush.bf16.msra.mxu0 0
        %880 = vmatpush.bf16.msra.mxu0 0
        %881 = vmatpush.bf16.msra.mxu0 0
        %882 = vmatpush.bf16.msra.mxu0 0
        %883 = vmatpush.bf16.msra.mxu0 0
        %884 = vmatpush.bf16.msra.mxu0 %v875
        %885 = vmatmul.bf16.gmra.mxu0 %v872
        %v886 = vpop.f32.mrf.mxu0
        %v887 = vadd.f32 0.0, %v886
        %v888 = vpop.f32.mrf.mxu0
        %889 = vdwg.mxu0
        %v890 = vpack.c.bf16 %v887, %v887
        %s891 = scalar_lea.vmem %s491, 8
        %v892 = vld [vmem:[%s891] sm:$0xf]
        %v893 = vld [vmem:[%s891 + $0x4] sm:$0xf]
        %v896 = vunpack.c.l.b16 %v892
        %v897 = vunpack.c.l.b16 %v893
        %v898 = vpack.c.b16 %v897, %v896
        %v901 = vsel %vm654, %v890, 0
        %903 = vmatpush.bf16.msra.mxu0 0
        %904 = vmatpush.bf16.msra.mxu0 0
        %905 = vmatpush.bf16.msra.mxu0 0
        %906 = vmatpush.bf16.msra.mxu0 0
        %907 = vmatpush.bf16.msra.mxu0 0
        %908 = vmatpush.bf16.msra.mxu0 0
        %909 = vmatpush.bf16.msra.mxu0 0
        %910 = vmatpush.bf16.msra.mxu0 %v898
        %911 = vmatmul.bf16.gmra.mxu0 %v901
        %v912 = vpop.f32.mrf.mxu0
        %v913 = vadd.f32 0.0, %v912
        %v914 = vpop.f32.mrf.mxu0
        %915 = vdwg.mxu0
        %v918 = vunpack.c.l.b16 %v727
        %v919 = vunpack.c.l.b16 %v728
        %v920 = vpack.c.b16 %v919, %v918
        %v923 = vsel %vm654, %v726, 0
        %925 = vmatpush.bf16.msra.mxu0 0
        %926 = vmatpush.bf16.msra.mxu0 0
        %927 = vmatpush.bf16.msra.mxu0 0
        %928 = vmatpush.bf16.msra.mxu0 0
        %929 = vmatpush.bf16.msra.mxu0 0
        %930 = vmatpush.bf16.msra.mxu0 0
        %931 = vmatpush.bf16.msra.mxu0 0
        %932 = vmatpush.bf16.msra.mxu0 %v920
        %933 = vmatmul.bf16.gmra.mxu0 %v923
        %v934 = vpop.f32.mrf.mxu0
        %v935 = vadd.f32 %v913, %v934
        %v936 = vpop.f32.mrf.mxu0
        %937 = vdwg.mxu0
        %v938 = vperm.slane %v553, 4
        %v939 = vadd.f32 %v935, %v938
        %v940 = vadd.f32 %v939, %v551
        %v941 = vsel %vm583, %v940, 0.0
        %942 = vadd.xlane.f32.xlu0 %v941
        %v943 = vpop.xlane.xlu0 %942
        %v944 = vrcp.pop 32.0
        %v945 = vmul.f32 32.0, %v944
        %v946 = vsub.f32 1.0, %v945
        %v947 = vmul.f32 %v944, %v946
        %v948 = vadd.f32 %v944, %v947
        %vm949 = vweird.f32 %v944
        %v950 = vsel %vm949, %v944, %v948
        %v951 = vmul.f32 %v943, %v950
        %v952 = vsub.f32 %v940, %v951
        %v953 = vmul.f32 %v952, %v952
        %v954 = vsel %vm583, %v953, 0.0
        %955 = vadd.xlane.f32.xlu0 %v954
        %v956 = vpop.xlane.xlu0 %955
        %v957 = vmul.f32 %v956, %v950
        %v958 = vadd.f32 %v957, 1e-12
        %v959 = vrsqrt.pop %v958
        %v960 = vmul.f32 %v959, %v958
        %v961 = vmul.f32 %v960, %v959
        %v962 = vmul.f32 0.5, %v961
        %v963 = vsub.f32 1.5, %v962
        %v964 = vmul.f32 %v959, %v963
        %vm965 = vweird.f32 %v958
        %vm966 = vweird.f32 %v959
        %vm967 = vmor %vm965, %vm966
        %v968 = vsel %vm967, %v959, %v964
        %v969 = vmul.f32 %v952, %v968
        %v970 = vperm.slane %v553, 0
        %v971 = vmul.f32 %v969, %v970
        %v972 = vperm.slane %v553, 1
        %v973 = vadd.f32 %v971, %v972
        %v974 = vpack.c.bf16 %v973, %v973
        %v975 = vld [vmem:[%s496] sm:$0xf]
        %v976 = vld [vmem:[%s496 + $0x4] sm:$0xf]
        %v977 = vld [vmem:[%s496 + $0x8] sm:$0xf]
        %v978 = vld [vmem:[%s496 + $0xc] sm:$0xf]
        %v979 = vld [vmem:[%s499] sm:$0x1]
        %v981 = vperm.slane %v979, 0
        %v987 = vunpack.c.l.b16 %v975
        %v988 = vunpack.c.l.b16 %v976
        %v989 = vunpack.c.l.b16 %v977
        %v990 = vunpack.c.l.b16 %v978
        %v991 = vpack.c.b16 %v988, %v987
        %v992 = vpack.c.b16 %v990, %v989
        %v996 = vsel %vm583, %v974, 0
        %998 = vmatpush.bf16.msra.mxu0 0
        %999 = vmatpush.bf16.msra.mxu0 0
        %1000 = vmatpush.bf16.msra.mxu0 0
        %1001 = vmatpush.bf16.msra.mxu0 0
        %1002 = vmatpush.bf16.msra.mxu0 0
        %1003 = vmatpush.bf16.msra.mxu0 0
        %1004 = vmatpush.bf16.msra.mxu0 %v992
        %1005 = vmatpush.bf16.msra.mxu0 %v991
        %1006 = vmatmul.bf16.gmra.mxu0 %v996
        %v1007 = vpop.f32.mrf.mxu0
        %v1008 = vadd.f32 %v981, %v1007
        %v1009 = vpop.f32.mrf.mxu0
        %1010 = vdwg.mxu0
        %v1011 = vmul.f32 %v1008, 0.5
        %v1012 = vmul.f32 %v1008, 0.70710677
        %v1013 = vmul.f32 %v1012, %v1012
        %v1014 = vmin.f32 16.0, %v1013
        %v1015 = vmul.f32 %v1014, 2.1237322e-06
        %v1016 = vadd.f32 %v1015, 0.00028619796
        %v1017 = vmul.f32 %v1014, %v1016
        %v1018 = vadd.f32 %v1017, 0.0036580483
        %v1019 = vmul.f32 %v1014, %v1018
        %v1020 = vadd.f32 %v1019, 0.05243302
        %v1021 = vmul.f32 %v1014, %v1020
        %v1022 = vadd.f32 %v1021, 0.18741608
        %v1023 = vmul.f32 %v1014, %v1022
        %v1024 = vadd.f32 %v1023, 1.1283791
        %v1025 = vmul.f32 %v1012, %v1024
        %v1026 = vmul.f32 %v1014, 3.8918573e-05
        %v1027 = vadd.f32 %v1026, 0.001143296
        %v1028 = vmul.f32 %v1014, %v1027
        %v1029 = vadd.f32 %v1028, 0.014752088
        %v1030 = vmul.f32 %v1014, %v1029
        %v1031 = vadd.f32 %v1030, 0.112945676
        %v1032 = vmul.f32 %v1014, %v1031
        %v1033 = vadd.f32 %v1032, 0.4994258
        %v1034 = vmul.f32 %v1014, %v1033
        %v1035 = vadd.f32 %v1034, 1.0
        %v1036 = vrcp.pop %v1035
        %v1037 = vmul.f32 %v1035, %v1036
        %v1038 = vsub.f32 1.0, %v1037
        %v1039 = vmul.f32 %v1036, %v1038
        %v1040 = vadd.f32 %v1036, %v1039
        %vm1041 = vweird.f32 %v1035
        %vm1042 = vweird.f32 %v1036
        %vm1043 = vmor %vm1041, %vm1042
        %v1044 = vsel %vm1043, %v1036, %v1040
        %v1045 = vand.u32 2147483647, %v1035
        %vm1046 = vcmp.eq.f32.partialorder %v1045, 8.507059e+37
        %v1047 = vand.u32 %v1035, 2147483648
        %v1048 = vor.u32 1.1754944e-38, %v1047
        %v1049 = vsel %vm1046, %v1048, %v1044
        %v1050 = vmul.f32 %v1025, %v1049
        %v1051 = vmin.f32 %v1050, 1.0
        %v1052 = vmax.f32 %v1051, -1.0
        %v1053 = vadd.f32 %v1052, 1.0
        %v1054 = vmul.f32 %v1011, %v1053
        %v1055 = vpack.c.bf16 %v1054, %v1054
        %v1056 = vld [vmem:[%s504] sm:$0xf]
        %v1057 = vld [vmem:[%s504 + $0x4] sm:$0xf]
        %v1058 = vld [vmem:[%s504 + $0x8] sm:$0xf]
        %v1059 = vld [vmem:[%s504 + $0xc] sm:$0xf]
        %v1060 = vld [vmem:[%s504 + $0x10] sm:$0xf]
        %v1061 = vld [vmem:[%s504 + $0x14] sm:$0xf]
        %v1062 = vld [vmem:[%s504 + $0x18] sm:$0xf]
        %v1063 = vld [vmem:[%s504 + $0x1c] sm:$0xf]
        %v1064 = vperm.slane %v553, 5
        %v1073 = vunpack.c.l.b16 %v1056
        %v1074 = vunpack.c.l.b16 %v1057
        %v1075 = vunpack.c.l.b16 %v1058
        %v1076 = vunpack.c.l.b16 %v1059
        %v1077 = vunpack.c.l.b16 %v1060
        %v1078 = vunpack.c.l.b16 %v1061
        %v1079 = vunpack.c.l.b16 %v1062
        %v1080 = vunpack.c.l.b16 %v1063
        %v1081 = vpack.c.b16 %v1074, %v1073
        %v1082 = vpack.c.b16 %v1076, %v1075
        %v1083 = vpack.c.b16 %v1078, %v1077
        %v1084 = vpack.c.b16 %v1080, %v1079
        %vm1089 = vcmask 523264
        %v1091 = vsel %vm1089, %v1055, 0
        %1093 = vmatpush.bf16.msra.mxu0 0
        %1094 = vmatpush.bf16.msra.mxu0 0
        %1095 = vmatpush.bf16.msra.mxu0 0
        %1096 = vmatpush.bf16.msra.mxu0 0
        %1097 = vmatpush.bf16.msra.mxu0 %v1084
        %1098 = vmatpush.bf16.msra.mxu0 %v1083
        %1099 = vmatpush.bf16.msra.mxu0 %v1082
        %1100 = vmatpush.bf16.msra.mxu0 %v1081
        %1101 = vmatmul.bf16.gmra.mxu0 %v1091
        %v1102 = vpop.f32.mrf.mxu0
        %v1103 = vadd.f32 %v1064, %v1102
        %v1104 = vpop.f32.mrf.mxu0
        %1105 = vdwg.mxu0
        %v1106 = vadd.f32 %v1103, %v973
        %v1107 = vsel %vm583, %v1106, 0.0
        %1108 = vadd.xlane.f32.xlu0 %v1107
        %v1109 = vpop.xlane.xlu0 %1108
        %v1110 = vmul.f32 %v1109, %v950
        %v1111 = vsub.f32 %v1106, %v1110
        %v1112 = vmul.f32 %v1111, %v1111
        %v1113 = vsel %vm583, %v1112, 0.0
        %1114 = vadd.xlane.f32.xlu0 %v1113
        %v1115 = vpop.xlane.xlu0 %1114
        %v1116 = vmul.f32 %v1115, %v950
        %v1117 = vadd.f32 %v1116, 1e-12
        %v1118 = vrsqrt.pop %v1117
        %v1119 = vmul.f32 %v1118, %v1117
        %v1120 = vmul.f32 %v1119, %v1118
        %v1121 = vmul.f32 0.5, %v1120
        %v1122 = vsub.f32 1.5, %v1121
        %v1123 = vmul.f32 %v1118, %v1122
        %vm1124 = vweird.f32 %v1117
        %vm1125 = vweird.f32 %v1118
        %vm1126 = vmor %vm1124, %vm1125
        %v1127 = vsel %vm1126, %v1118, %v1123
        %v1128 = vmul.f32 %v1111, %v1127
        %v1129 = vperm.slane %v553, 2
        %v1130 = vmul.f32 %v1128, %v1129
        %v1131 = vperm.slane %v553, 3
        %v1132 = vadd.f32 %v1130, %v1131
        %1133 = vst.msk [vmem:[%s470] sm:$0xff] %vm583, %v1132
        %s1134 = sand.u32 %s299, 1
        %s1135 = scalar_lea.sflag [#allocation3], %s1134
        %s1136 = sand.u32 %s299, 1
        %s1137 = smul.addr %s1136, 8
        %s1138 = scalar_lea.vmem [#allocation2], %s1137
        // Predicated region
        $region65: #{pretrained_language_model_forward.1} parent=59 // pred_check
          %p1139 = pneg %p309
        $region66: #{pretrained_language_model_forward.1} parent=59 // pred_check_branch
          %1141 = sbr.rel (%p1139) target = $region68
        $region67: #{pretrained_language_model_forward.1} parent=59 // pred_region
          %1143 = vsyncadd %s1135, 0
          %s1144 = smul.addr %s28, 8
          %s1145 = scalar_lea.hbm %s10, %s1144
          %s1147 = sshll.u32 %s1138, 4
          %s1148 = int_to_ptr.vmem [resolvable:$true] %s1147
          %s1149 = sshll.u32 %s1145, 4
          %s1150 = int_to_ptr.hbm [resolvable:$true] %s1149
          %1152 = dma.vmem_to_hbm [thread:$0]  %s1148, 128, %s1150, %s1135
        $region68: #{pretrained_language_model_forward.1} parent=59 // pred_fallthru
          _
      $region60: #{pretrained_language_model_forward.1} parent=5 // pred_fallthru
        _
      %p1153 = scmp.le.s32.totalorder 2, %s19
      // Predicated region
      $region69: #{pretrained_language_model_forward.1} parent=5 // pred_check
        %p1154 = pneg %p1153
      $region70: #{pretrained_language_model_forward.1} parent=5 // pred_check_branch
        %1156 = sbr.rel (%p1154) target = $region72
      $region71: #{pretrained_language_model_forward.1} parent=5 // pred_region
        %s1157 = ssub.s32 %s19, 2
        // Predicated region
        $region73: #{pretrained_language_model_forward.1} parent=71 // pred_check
          %p1158 = pneg %p315
        $region74: #{pretrained_language_model_forward.1} parent=71 // pred_check_branch
          %1160 = sbr.rel (%p1158) target = $region76
        $region75: #{pretrained_language_model_forward.1} parent=71 // pred_region
          %s1161 = sand.u32 %s300, 1
          %s1162 = scalar_lea.sflag [#allocation3], %s1161
          %s1163 = sand.u32 %s300, 1
          %s1164 = smul.addr %s1163, 8
          %s1165 = scalar_lea.vmem [#allocation2], %s1164
          %1167 = dma.done %s1162, 128
        $region76: #{pretrained_language_model_forward.1} parent=71 // pred_fallthru
          _
      $region72: #{pretrained_language_model_forward.1} parent=5 // pred_fallthru
        _
    $region6: #{pretrained_language_model_forward.1} parent=1 // loop_footer
      %s23 = sadd.s32 1, %s19
    $region7: #{pretrained_language_model_forward.1} parent=1 // loop_footer_branch
      %18 = sbr.rel target = $region3
    $region8: #{pretrained_language_model_forward.1} parent=1 // loop_exit
      _
    %1168 = vsyncpa [#allocation3], 1
    %s1169 = scalar_lea.sflag [#allocation3], 1
    %1170 = vsyncpa %s1169, 1

</llo_original>
